<compile_context>
chip_gen: v7x
topology: tpu7x:2x2x1
jax: 0.10.0
libtpu: 0.0.40
codegen_flags: <defaults>
</compile_context>

<pallas_src>
import functools
import math

import jax
import jax.numpy as jnp
from jax.experimental import pallas as pl
from jax.experimental.pallas import tpu as pltpu


def _round_up(x: int, m: int) -> int:
    return (x + m - 1) // m * m


# ----------------------------------------------------------------------------
# Pallas kernel: the whole Block (all layers) on a (c_pad, lanes_blk) slab.
# ----------------------------------------------------------------------------
def _block_kernel(x_ref, w_ref, b_ref, mask_ref, o_ref, *, layer_dims, c_pad):
    mask = mask_ref[...]                      # (1, N)  1.0 on real time steps
    x = x_ref[...]                            # (C, N)  padding columns already zero
    zcol = jnp.zeros((c_pad, 1), jnp.float32)
    conv = 0
    for (cin, cout) in layer_dims:            # unrolled at trace time
        res = x
        for j in range(3):
            # One fused MXU pass for all 3 taps: (3C, C) @ (C, N) -> (3C, N).
            # bf16 inputs, f32 accumulation.
            q = jnp.dot(w_ref[conv], x.astype(jnp.bfloat16),
                        preferred_element_type=jnp.float32)
            q_prev = q[:c_pad]                # tap k=0 : contributes via x[t-1]
            q_mid = q[c_pad:2 * c_pad]        # tap k=1 : x[t]
            q_next = q[2 * c_pad:]            # tap k=2 : x[t+1]
            # out[:, t] = q_prev[:, t-1] + q_mid[:, t] + q_next[:, t+1] + bias
            # (zero-filled 1-lane shifts, matching the Conv1d zero padding).
            y = (jnp.concatenate([zcol, q_prev[:, :-1]], axis=1)
                 + q_mid
                 + jnp.concatenate([q_next[:, 1:], zcol], axis=1)
                 + b_ref[conv])
            # Keep padding columns exactly zero: required so spill+bias in the
            # columns adjacent to real data never leaks across batch segments
            # through the +-1 shift of the NEXT conv.
            y = y * mask
            if j < 2:                         # LeakyReLU(0.2) after convs 0 and 1
                y = jnp.maximum(y, 0.2 * y)
            x = y
            conv += 1
        if cin == cout:                       # residual iff shapes match
            x = x + res
    o_ref[...] = x


# ----------------------------------------------------------------------------
# Wrapper: pack to kernel layout, run kernel, unpack to PyTorch (B, C, T) layout.
# ----------------------------------------------------------------------------
def block_forward_pallas(x, weights, biases, layer_dims, *, target_lanes=2048):
    """x: (B, feature_dim, T) float32 -> (B, feature_dim, T), matching Block.forward."""
    b, c_in0, t = x.shape
    feat_out = layer_dims[-1][1]
    n_conv = len(weights)

    # Channels (sublanes): multiple of 8 is enough for f32 -> c_pad = 32 here.
    c_pad = _round_up(max(max(ci, co) for ci, co in layer_dims), 8)
    # Lanes: each batch segment padded to a multiple of 128 with >= 1 zero column.
    t_pad = _round_up(t + 1, 128)

    # One grid block per group of whole batch segments (no halos needed).
    segs_per_blk = max(1, min(b, target_lanes // t_pad))
    b_pad = _round_up(b, segs_per_blk)
    lanes_blk = segs_per_blk * t_pad
    n_tot = b_pad * t_pad
    num_blocks = n_tot // lanes_blk

    # ---- pack operands into the kernel layout (pure XLA glue) ----
    xp = jnp.zeros((b_pad, c_pad, t_pad), jnp.float32).at[:b, :c_in0, :t].set(x)
    x_packed = jnp.transpose(xp, (1, 0, 2)).reshape(c_pad, n_tot)

    w_rows, b_rows = [], []
    for w, bb in zip(weights, biases):
        co, ci, _ = w.shape
        taps = [jnp.zeros((c_pad, c_pad), jnp.float32).at[:co, :ci].set(w[:, :, k])
                for k in range(3)]
        w_rows.append(jnp.concatenate(taps, axis=0))            # (3*c_pad, c_pad)
        b_rows.append(jnp.zeros((c_pad,), jnp.float32).at[:co].set(bb))
    w_all = jnp.stack(w_rows).astype(jnp.bfloat16)               # (n_conv, 3*c_pad, c_pad)
    b_all = jnp.stack(b_rows)[:, :, None]                        # (n_conv, c_pad, 1) f32

    # Per-block mask (identical for every block since blocks hold whole segments).
    mask = jnp.tile((jnp.arange(t_pad) < t).astype(jnp.float32), segs_per_blk)[None, :]

    kernel = functools.partial(_block_kernel,
                               layer_dims=tuple(layer_dims), c_pad=c_pad)
    out = pl.pallas_call(
        kernel,
        out_shape=jax.ShapeDtypeStruct((c_pad, n_tot), jnp.float32),
        grid_spec=pltpu.PrefetchScalarGridSpec(
            num_scalar_prefetch=0,
            grid=(num_blocks,),
            in_specs=[
                pl.BlockSpec((c_pad, lanes_blk), lambda i: (0, i)),
                pl.BlockSpec((n_conv, 3 * c_pad, c_pad), lambda i: (0, 0, 0)),
                pl.BlockSpec((n_conv, c_pad, 1), lambda i: (0, 0, 0)),
                pl.BlockSpec((1, lanes_blk), lambda i: (0, 0)),
            ],
            out_specs=pl.BlockSpec((c_pad, lanes_blk), lambda i: (0, i)),
        ),
        compiler_params=pltpu.CompilerParams(
            dimension_semantics=("parallel",)),
    )(x_packed, w_all, b_all, mask)

    out = out.reshape(c_pad, b_pad, t_pad).transpose(1, 0, 2)[:b, :feat_out, :t]
    return out


# ----------------------------------------------------------------------------
# Pure-JAX fp32 reference of Block.forward (for correctness check only).
# ----------------------------------------------------------------------------
def _conv1d_ref(x, w, bias):
    t = x.shape[-1]
    xp = jnp.pad(x, ((0, 0), (0, 0), (1, 1)))
    y = jnp.zeros((x.shape[0], w.shape[0], t), jnp.float32) + bias[None, :, None]
    for k in range(3):
        y = y + jnp.einsum('oi,bit->bot', w[:, :, k], xp[:, :, k:k + t],
                           precision=jax.lax.Precision.HIGHEST)
    return y


def block_forward_ref(x, weights, biases, layer_dims):
    i = 0
    for (cin, cout) in layer_dims:
        res = x
        y = x
        for j in range(3):
            y = _conv1d_ref(y, weights[i], biases[i])
            if j < 2:
                y = jnp.where(y > 0, y, 0.2 * y)
            i += 1
        x = y + res if cin == cout else y
    return x


if __name__ == "__main__":
    B, FEAT, HID, T, NUM_FLOW_LAYERS = 2, 16, 32, 64, 3

    layer_dims = ([(FEAT, HID)]
                  + [(HID, HID)] * (NUM_FLOW_LAYERS - 2)
                  + [(HID, FEAT)])

    # Deterministic parameters mimicking the Conv1d stack.
    key = jax.random.PRNGKey(0)
    weights, biases = [], []
    for (cin, cout) in layer_dims:
        for j in range(3):
            c_in_j = cin if j == 0 else cout
            key, kw, kb = jax.random.split(key, 3)
            weights.append(jax.random.normal(kw, (cout, c_in_j, 3), jnp.float32)
                           / math.sqrt(3.0 * c_in_j))
            biases.append(0.1 * jax.random.normal(kb, (cout,), jnp.float32))
    key, kx = jax.random.split(key)
    x = jax.random.normal(kx, (B, FEAT, T), jnp.float32)

    out = jax.block_until_ready(block_forward_pallas(x, weights, biases, layer_dims))
    ref = jax.block_until_ready(block_forward_ref(x, weights, biases, layer_dims))

    assert out.shape == (B, FEAT, T), out.shape
    assert bool(jnp.all(jnp.isfinite(out)))
    err = float(jnp.max(jnp.abs(out - ref) / (1.0 + jnp.abs(ref))))
    assert err < 0.1, f"kernel/reference mismatch: max scaled err = {err}"
    print("KERNEL_OK")
</pallas_src>

<mosaic_0001>
module attributes {stable_mosaic.version = 11 : i64} {
  func.func @_block_kernel(%arg0: i32, %arg1: memref<32x256xf32, #tpu.memory_space<vmem>>, %arg2: memref<9x96x32xbf16, #tpu.memory_space<vmem>>, %arg3: memref<9x32x1xf32, #tpu.memory_space<vmem>>, %arg4: memref<1x256xf32, #tpu.memory_space<vmem>>, %arg5: memref<32x256xf32, #tpu.memory_space<vmem>>) attributes {dimension_semantics = [#tpu.dimension_semantics<parallel>], iteration_bounds = array<i64: 1>, scalar_prefetch = 0 : i64, scratch_operands = 0 : i64, tpu.core_type = #tpu.core_type<tc>, window_params = [{transform_indices = @transform_0, window_bounds = array<i64: 32, 256>}, {pipeline_mode = #tpu.pipeline_mode<synchronous>, transform_indices = @transform_1, window_bounds = array<i64: 9, 96, 32>}, {pipeline_mode = #tpu.pipeline_mode<synchronous>, transform_indices = @transform_2, window_bounds = array<i64: 9, 32, 1>}, {pipeline_mode = #tpu.pipeline_mode<synchronous>, transform_indices = @transform_3, window_bounds = array<i64: 1, 256>}, {transform_indices = @transform_4, window_bounds = array<i64: 32, 256>}]} {
    %c0 = arith.constant 0 : index
    %c0_0 = arith.constant 0 : index
    %0 = vector.load %arg4[%c0, %c0_0] : memref<1x256xf32, #tpu.memory_space<vmem>>, vector<1x256xf32>
    %c0_1 = arith.constant 0 : index
    %c0_2 = arith.constant 0 : index
    %1 = vector.load %arg1[%c0_1, %c0_2] : memref<32x256xf32, #tpu.memory_space<vmem>>, vector<32x256xf32>
    %cst = arith.constant 0.000000e+00 : f32
    %2 = vector.broadcast %cst : f32 to vector<32x1xf32>
    %c0_3 = arith.constant 0 : index
    %c0_4 = arith.constant 0 : index
    %c0_5 = arith.constant 0 : index
    %3 = vector.load %arg2[%c0_3, %c0_4, %c0_5] : memref<9x96x32xbf16, #tpu.memory_space<vmem>>, vector<1x96x32xbf16>
    %4 = vector.shape_cast %3 : vector<1x96x32xbf16> to vector<96x32xbf16>
    %5 = arith.truncf %1 : vector<32x256xf32> to vector<32x256xbf16>
    %cst_6 = arith.constant dense<0.000000e+00> : vector<96x256xf32>
    %6 = tpu.matmul %4, %5, %cst_6 {dimension_numbers = #tpu.dot_dimension_numbers<[1], [0], [0], [1], [0, 0, 1, 1], [], []>} : vector<96x32xbf16>, vector<32x256xbf16>, vector<96x256xf32> -> vector<96x256xf32>
    %7 = vector.extract_strided_slice %6 {offsets = [0, 0], sizes = [32, 256], strides = [1, 1]} : vector<96x256xf32> to vector<32x256xf32>
    %8 = vector.extract_strided_slice %6 {offsets = [32, 0], sizes = [32, 256], strides = [1, 1]} : vector<96x256xf32> to vector<32x256xf32>
    %9 = vector.extract_strided_slice %6 {offsets = [64, 0], sizes = [32, 256], strides = [1, 1]} : vector<96x256xf32> to vector<32x256xf32>
    %10 = vector.extract_strided_slice %7 {offsets = [0, 0], sizes = [32, 255], strides = [1, 1]} : vector<32x256xf32> to vector<32x255xf32>
    %11 = tpu.concatenate %2, %10 in 1 : vector<32x1xf32>, vector<32x255xf32> -> vector<32x256xf32>
    %12 = arith.addf %11, %8 : vector<32x256xf32>
    %13 = vector.extract_strided_slice %9 {offsets = [0, 1], sizes = [32, 255], strides = [1, 1]} : vector<32x256xf32> to vector<32x255xf32>
    %14 = tpu.concatenate %13, %2 in 1 : vector<32x255xf32>, vector<32x1xf32> -> vector<32x256xf32>
    %15 = arith.addf %12, %14 : vector<32x256xf32>
    %c0_7 = arith.constant 0 : index
    %c0_8 = arith.constant 0 : index
    %c0_9 = arith.constant 0 : index
    %16 = vector.load %arg3[%c0_7, %c0_8, %c0_9] : memref<9x32x1xf32, #tpu.memory_space<vmem>>, vector<1x32x1xf32>
    %17 = vector.shape_cast %16 : vector<1x32x1xf32> to vector<32x1xf32>
    %18 = vector.broadcast %17 : vector<32x1xf32> to vector<32x256xf32>
    %19 = arith.addf %15, %18 : vector<32x256xf32>
    %20 = vector.broadcast %0 : vector<1x256xf32> to vector<32x256xf32>
    %21 = arith.mulf %19, %20 : vector<32x256xf32>
    %cst_10 = arith.constant 2.000000e-01 : f32
    %22 = vector.broadcast %cst_10 : f32 to vector<32x256xf32>
    %23 = arith.mulf %22, %21 : vector<32x256xf32>
    %24 = arith.maximumf %21, %23 : vector<32x256xf32>
    %c1 = arith.constant 1 : index
    %c0_11 = arith.constant 0 : index
    %c0_12 = arith.constant 0 : index
    %25 = vector.load %arg2[%c1, %c0_11, %c0_12] : memref<9x96x32xbf16, #tpu.memory_space<vmem>>, vector<1x96x32xbf16>
    %26 = vector.shape_cast %25 : vector<1x96x32xbf16> to vector<96x32xbf16>
    %27 = arith.truncf %24 : vector<32x256xf32> to vector<32x256xbf16>
    %cst_13 = arith.constant dense<0.000000e+00> : vector<96x256xf32>
    %28 = tpu.matmul %26, %27, %cst_13 {dimension_numbers = #tpu.dot_dimension_numbers<[1], [0], [0], [1], [0, 0, 1, 1], [], []>} : vector<96x32xbf16>, vector<32x256xbf16>, vector<96x256xf32> -> vector<96x256xf32>
    %29 = vector.extract_strided_slice %28 {offsets = [0, 0], sizes = [32, 256], strides = [1, 1]} : vector<96x256xf32> to vector<32x256xf32>
    %30 = vector.extract_strided_slice %28 {offsets = [32, 0], sizes = [32, 256], strides = [1, 1]} : vector<96x256xf32> to vector<32x256xf32>
    %31 = vector.extract_strided_slice %28 {offsets = [64, 0], sizes = [32, 256], strides = [1, 1]} : vector<96x256xf32> to vector<32x256xf32>
    %32 = vector.extract_strided_slice %29 {offsets = [0, 0], sizes = [32, 255], strides = [1, 1]} : vector<32x256xf32> to vector<32x255xf32>
    %33 = tpu.concatenate %2, %32 in 1 : vector<32x1xf32>, vector<32x255xf32> -> vector<32x256xf32>
    %34 = arith.addf %33, %30 : vector<32x256xf32>
    %35 = vector.extract_strided_slice %31 {offsets = [0, 1], sizes = [32, 255], strides = [1, 1]} : vector<32x256xf32> to vector<32x255xf32>
    %36 = tpu.concatenate %35, %2 in 1 : vector<32x255xf32>, vector<32x1xf32> -> vector<32x256xf32>
    %37 = arith.addf %34, %36 : vector<32x256xf32>
    %c1_14 = arith.constant 1 : index
    %c0_15 = arith.constant 0 : index
    %c0_16 = arith.constant 0 : index
    %38 = vector.load %arg3[%c1_14, %c0_15, %c0_16] : memref<9x32x1xf32, #tpu.memory_space<vmem>>, vector<1x32x1xf32>
    %39 = vector.shape_cast %38 : vector<1x32x1xf32> to vector<32x1xf32>
    %40 = vector.broadcast %39 : vector<32x1xf32> to vector<32x256xf32>
    %41 = arith.addf %37, %40 : vector<32x256xf32>
    %42 = vector.broadcast %0 : vector<1x256xf32> to vector<32x256xf32>
    %43 = arith.mulf %41, %42 : vector<32x256xf32>
    %cst_17 = arith.constant 2.000000e-01 : f32
    %44 = vector.broadcast %cst_17 : f32 to vector<32x256xf32>
    %45 = arith.mulf %44, %43 : vector<32x256xf32>
    %46 = arith.maximumf %43, %45 : vector<32x256xf32>
    %c2 = arith.constant 2 : index
    %c0_18 = arith.constant 0 : index
    %c0_19 = arith.constant 0 : index
    %47 = vector.load %arg2[%c2, %c0_18, %c0_19] : memref<9x96x32xbf16, #tpu.memory_space<vmem>>, vector<1x96x32xbf16>
    %48 = vector.shape_cast %47 : vector<1x96x32xbf16> to vector<96x32xbf16>
    %49 = arith.truncf %46 : vector<32x256xf32> to vector<32x256xbf16>
    %cst_20 = arith.constant dense<0.000000e+00> : vector<96x256xf32>
    %50 = tpu.matmul %48, %49, %cst_20 {dimension_numbers = #tpu.dot_dimension_numbers<[1], [0], [0], [1], [0, 0, 1, 1], [], []>} : vector<96x32xbf16>, vector<32x256xbf16>, vector<96x256xf32> -> vector<96x256xf32>
    %51 = vector.extract_strided_slice %50 {offsets = [0, 0], sizes = [32, 256], strides = [1, 1]} : vector<96x256xf32> to vector<32x256xf32>
    %52 = vector.extract_strided_slice %50 {offsets = [32, 0], sizes = [32, 256], strides = [1, 1]} : vector<96x256xf32> to vector<32x256xf32>
    %53 = vector.extract_strided_slice %50 {offsets = [64, 0], sizes = [32, 256], strides = [1, 1]} : vector<96x256xf32> to vector<32x256xf32>
    %54 = vector.extract_strided_slice %51 {offsets = [0, 0], sizes = [32, 255], strides = [1, 1]} : vector<32x256xf32> to vector<32x255xf32>
    %55 = tpu.concatenate %2, %54 in 1 : vector<32x1xf32>, vector<32x255xf32> -> vector<32x256xf32>
    %56 = arith.addf %55, %52 : vector<32x256xf32>
    %57 = vector.extract_strided_slice %53 {offsets = [0, 1], sizes = [32, 255], strides = [1, 1]} : vector<32x256xf32> to vector<32x255xf32>
    %58 = tpu.concatenate %57, %2 in 1 : vector<32x255xf32>, vector<32x1xf32> -> vector<32x256xf32>
    %59 = arith.addf %56, %58 : vector<32x256xf32>
    %c2_21 = arith.constant 2 : index
    %c0_22 = arith.constant 0 : index
    %c0_23 = arith.constant 0 : index
    %60 = vector.load %arg3[%c2_21, %c0_22, %c0_23] : memref<9x32x1xf32, #tpu.memory_space<vmem>>, vector<1x32x1xf32>
    %61 = vector.shape_cast %60 : vector<1x32x1xf32> to vector<32x1xf32>
    %62 = vector.broadcast %61 : vector<32x1xf32> to vector<32x256xf32>
    %63 = arith.addf %59, %62 : vector<32x256xf32>
    %64 = vector.broadcast %0 : vector<1x256xf32> to vector<32x256xf32>
    %65 = arith.mulf %63, %64 : vector<32x256xf32>
    %c3 = arith.constant 3 : index
    %c0_24 = arith.constant 0 : index
    %c0_25 = arith.constant 0 : index
    %66 = vector.load %arg2[%c3, %c0_24, %c0_25] : memref<9x96x32xbf16, #tpu.memory_space<vmem>>, vector<1x96x32xbf16>
    %67 = vector.shape_cast %66 : vector<1x96x32xbf16> to vector<96x32xbf16>
    %68 = arith.truncf %65 : vector<32x256xf32> to vector<32x256xbf16>
    %cst_26 = arith.constant dense<0.000000e+00> : vector<96x256xf32>
    %69 = tpu.matmul %67, %68, %cst_26 {dimension_numbers = #tpu.dot_dimension_numbers<[1], [0], [0], [1], [0, 0, 1, 1], [], []>} : vector<96x32xbf16>, vector<32x256xbf16>, vector<96x256xf32> -> vector<96x256xf32>
    %70 = vector.extract_strided_slice %69 {offsets = [0, 0], sizes = [32, 256], strides = [1, 1]} : vector<96x256xf32> to vector<32x256xf32>
    %71 = vector.extract_strided_slice %69 {offsets = [32, 0], sizes = [32, 256], strides = [1, 1]} : vector<96x256xf32> to vector<32x256xf32>
    %72 = vector.extract_strided_slice %69 {offsets = [64, 0], sizes = [32, 256], strides = [1, 1]} : vector<96x256xf32> to vector<32x256xf32>
    %73 = vector.extract_strided_slice %70 {offsets = [0, 0], sizes = [32, 255], strides = [1, 1]} : vector<32x256xf32> to vector<32x255xf32>
    %74 = tpu.concatenate %2, %73 in 1 : vector<32x1xf32>, vector<32x255xf32> -> vector<32x256xf32>
    %75 = arith.addf %74, %71 : vector<32x256xf32>
    %76 = vector.extract_strided_slice %72 {offsets = [0, 1], sizes = [32, 255], strides = [1, 1]} : vector<32x256xf32> to vector<32x255xf32>
    %77 = tpu.concatenate %76, %2 in 1 : vector<32x255xf32>, vector<32x1xf32> -> vector<32x256xf32>
    %78 = arith.addf %75, %77 : vector<32x256xf32>
    %c3_27 = arith.constant 3 : index
    %c0_28 = arith.constant 0 : index
    %c0_29 = arith.constant 0 : index
    %79 = vector.load %arg3[%c3_27, %c0_28, %c0_29] : memref<9x32x1xf32, #tpu.memory_space<vmem>>, vector<1x32x1xf32>
    %80 = vector.shape_cast %79 : vector<1x32x1xf32> to vector<32x1xf32>
    %81 = vector.broadcast %80 : vector<32x1xf32> to vector<32x256xf32>
    %82 = arith.addf %78, %81 : vector<32x256xf32>
    %83 = vector.broadcast %0 : vector<1x256xf32> to vector<32x256xf32>
    %84 = arith.mulf %82, %83 : vector<32x256xf32>
    %cst_30 = arith.constant 2.000000e-01 : f32
    %85 = vector.broadcast %cst_30 : f32 to vector<32x256xf32>
    %86 = arith.mulf %85, %84 : vector<32x256xf32>
    %87 = arith.maximumf %84, %86 : vector<32x256xf32>
    %c4 = arith.constant 4 : index
    %c0_31 = arith.constant 0 : index
    %c0_32 = arith.constant 0 : index
    %88 = vector.load %arg2[%c4, %c0_31, %c0_32] : memref<9x96x32xbf16, #tpu.memory_space<vmem>>, vector<1x96x32xbf16>
    %89 = vector.shape_cast %88 : vector<1x96x32xbf16> to vector<96x32xbf16>
    %90 = arith.truncf %87 : vector<32x256xf32> to vector<32x256xbf16>
    %cst_33 = arith.constant dense<0.000000e+00> : vector<96x256xf32>
    %91 = tpu.matmul %89, %90, %cst_33 {dimension_numbers = #tpu.dot_dimension_numbers<[1], [0], [0], [1], [0, 0, 1, 1], [], []>} : vector<96x32xbf16>, vector<32x256xbf16>, vector<96x256xf32> -> vector<96x256xf32>
    %92 = vector.extract_strided_slice %91 {offsets = [0, 0], sizes = [32, 256], strides = [1, 1]} : vector<96x256xf32> to vector<32x256xf32>
    %93 = vector.extract_strided_slice %91 {offsets = [32, 0], sizes = [32, 256], strides = [1, 1]} : vector<96x256xf32> to vector<32x256xf32>
    %94 = vector.extract_strided_slice %91 {offsets = [64, 0], sizes = [32, 256], strides = [1, 1]} : vector<96x256xf32> to vector<32x256xf32>
    %95 = vector.extract_strided_slice %92 {offsets = [0, 0], sizes = [32, 255], strides = [1, 1]} : vector<32x256xf32> to vector<32x255xf32>
    %96 = tpu.concatenate %2, %95 in 1 : vector<32x1xf32>, vector<32x255xf32> -> vector<32x256xf32>
    %97 = arith.addf %96, %93 : vector<32x256xf32>
    %98 = vector.extract_strided_slice %94 {offsets = [0, 1], sizes = [32, 255], strides = [1, 1]} : vector<32x256xf32> to vector<32x255xf32>
    %99 = tpu.concatenate %98, %2 in 1 : vector<32x255xf32>, vector<32x1xf32> -> vector<32x256xf32>
    %100 = arith.addf %97, %99 : vector<32x256xf32>
    %c4_34 = arith.constant 4 : index
    %c0_35 = arith.constant 0 : index
    %c0_36 = arith.constant 0 : index
    %101 = vector.load %arg3[%c4_34, %c0_35, %c0_36] : memref<9x32x1xf32, #tpu.memory_space<vmem>>, vector<1x32x1xf32>
    %102 = vector.shape_cast %101 : vector<1x32x1xf32> to vector<32x1xf32>
    %103 = vector.broadcast %102 : vector<32x1xf32> to vector<32x256xf32>
    %104 = arith.addf %100, %103 : vector<32x256xf32>
    %105 = vector.broadcast %0 : vector<1x256xf32> to vector<32x256xf32>
    %106 = arith.mulf %104, %105 : vector<32x256xf32>
    %cst_37 = arith.constant 2.000000e-01 : f32
    %107 = vector.broadcast %cst_37 : f32 to vector<32x256xf32>
    %108 = arith.mulf %107, %106 : vector<32x256xf32>
    %109 = arith.maximumf %106, %108 : vector<32x256xf32>
    %c5 = arith.constant 5 : index
    %c0_38 = arith.constant 0 : index
    %c0_39 = arith.constant 0 : index
    %110 = vector.load %arg2[%c5, %c0_38, %c0_39] : memref<9x96x32xbf16, #tpu.memory_space<vmem>>, vector<1x96x32xbf16>
    %111 = vector.shape_cast %110 : vector<1x96x32xbf16> to vector<96x32xbf16>
    %112 = arith.truncf %109 : vector<32x256xf32> to vector<32x256xbf16>
    %cst_40 = arith.constant dense<0.000000e+00> : vector<96x256xf32>
    %113 = tpu.matmul %111, %112, %cst_40 {dimension_numbers = #tpu.dot_dimension_numbers<[1], [0], [0], [1], [0, 0, 1, 1], [], []>} : vector<96x32xbf16>, vector<32x256xbf16>, vector<96x256xf32> -> vector<96x256xf32>
    %114 = vector.extract_strided_slice %113 {offsets = [0, 0], sizes = [32, 256], strides = [1, 1]} : vector<96x256xf32> to vector<32x256xf32>
    %115 = vector.extract_strided_slice %113 {offsets = [32, 0], sizes = [32, 256], strides = [1, 1]} : vector<96x256xf32> to vector<32x256xf32>
    %116 = vector.extract_strided_slice %113 {offsets = [64, 0], sizes = [32, 256], strides = [1, 1]} : vector<96x256xf32> to vector<32x256xf32>
    %117 = vector.extract_strided_slice %114 {offsets = [0, 0], sizes = [32, 255], strides = [1, 1]} : vector<32x256xf32> to vector<32x255xf32>
    %118 = tpu.concatenate %2, %117 in 1 : vector<32x1xf32>, vector<32x255xf32> -> vector<32x256xf32>
    %119 = arith.addf %118, %115 : vector<32x256xf32>
    %120 = vector.extract_strided_slice %116 {offsets = [0, 1], sizes = [32, 255], strides = [1, 1]} : vector<32x256xf32> to vector<32x255xf32>
    %121 = tpu.concatenate %120, %2 in 1 : vector<32x255xf32>, vector<32x1xf32> -> vector<32x256xf32>
    %122 = arith.addf %119, %121 : vector<32x256xf32>
    %c5_41 = arith.constant 5 : index
    %c0_42 = arith.constant 0 : index
    %c0_43 = arith.constant 0 : index
    %123 = vector.load %arg3[%c5_41, %c0_42, %c0_43] : memref<9x32x1xf32, #tpu.memory_space<vmem>>, vector<1x32x1xf32>
    %124 = vector.shape_cast %123 : vector<1x32x1xf32> to vector<32x1xf32>
    %125 = vector.broadcast %124 : vector<32x1xf32> to vector<32x256xf32>
    %126 = arith.addf %122, %125 : vector<32x256xf32>
    %127 = vector.broadcast %0 : vector<1x256xf32> to vector<32x256xf32>
    %128 = arith.mulf %126, %127 : vector<32x256xf32>
    %129 = arith.addf %128, %65 : vector<32x256xf32>
    %c6 = arith.constant 6 : index
    %c0_44 = arith.constant 0 : index
    %c0_45 = arith.constant 0 : index
    %130 = vector.load %arg2[%c6, %c0_44, %c0_45] : memref<9x96x32xbf16, #tpu.memory_space<vmem>>, vector<1x96x32xbf16>
    %131 = vector.shape_cast %130 : vector<1x96x32xbf16> to vector<96x32xbf16>
    %132 = arith.truncf %129 : vector<32x256xf32> to vector<32x256xbf16>
    %cst_46 = arith.constant dense<0.000000e+00> : vector<96x256xf32>
    %133 = tpu.matmul %131, %132, %cst_46 {dimension_numbers = #tpu.dot_dimension_numbers<[1], [0], [0], [1], [0, 0, 1, 1], [], []>} : vector<96x32xbf16>, vector<32x256xbf16>, vector<96x256xf32> -> vector<96x256xf32>
    %134 = vector.extract_strided_slice %133 {offsets = [0, 0], sizes = [32, 256], strides = [1, 1]} : vector<96x256xf32> to vector<32x256xf32>
    %135 = vector.extract_strided_slice %133 {offsets = [32, 0], sizes = [32, 256], strides = [1, 1]} : vector<96x256xf32> to vector<32x256xf32>
    %136 = vector.extract_strided_slice %133 {offsets = [64, 0], sizes = [32, 256], strides = [1, 1]} : vector<96x256xf32> to vector<32x256xf32>
    %137 = vector.extract_strided_slice %134 {offsets = [0, 0], sizes = [32, 255], strides = [1, 1]} : vector<32x256xf32> to vector<32x255xf32>
    %138 = tpu.concatenate %2, %137 in 1 : vector<32x1xf32>, vector<32x255xf32> -> vector<32x256xf32>
    %139 = arith.addf %138, %135 : vector<32x256xf32>
    %140 = vector.extract_strided_slice %136 {offsets = [0, 1], sizes = [32, 255], strides = [1, 1]} : vector<32x256xf32> to vector<32x255xf32>
    %141 = tpu.concatenate %140, %2 in 1 : vector<32x255xf32>, vector<32x1xf32> -> vector<32x256xf32>
    %142 = arith.addf %139, %141 : vector<32x256xf32>
    %c6_47 = arith.constant 6 : index
    %c0_48 = arith.constant 0 : index
    %c0_49 = arith.constant 0 : index
    %143 = vector.load %arg3[%c6_47, %c0_48, %c0_49] : memref<9x32x1xf32, #tpu.memory_space<vmem>>, vector<1x32x1xf32>
    %144 = vector.shape_cast %143 : vector<1x32x1xf32> to vector<32x1xf32>
    %145 = vector.broadcast %144 : vector<32x1xf32> to vector<32x256xf32>
    %146 = arith.addf %142, %145 : vector<32x256xf32>
    %147 = vector.broadcast %0 : vector<1x256xf32> to vector<32x256xf32>
    %148 = arith.mulf %146, %147 : vector<32x256xf32>
    %cst_50 = arith.constant 2.000000e-01 : f32
    %149 = vector.broadcast %cst_50 : f32 to vector<32x256xf32>
    %150 = arith.mulf %149, %148 : vector<32x256xf32>
    %151 = arith.maximumf %148, %150 : vector<32x256xf32>
    %c7 = arith.constant 7 : index
    %c0_51 = arith.constant 0 : index
    %c0_52 = arith.constant 0 : index
    %152 = vector.load %arg2[%c7, %c0_51, %c0_52] : memref<9x96x32xbf16, #tpu.memory_space<vmem>>, vector<1x96x32xbf16>
    %153 = vector.shape_cast %152 : vector<1x96x32xbf16> to vector<96x32xbf16>
    %154 = arith.truncf %151 : vector<32x256xf32> to vector<32x256xbf16>
    %cst_53 = arith.constant dense<0.000000e+00> : vector<96x256xf32>
    %155 = tpu.matmul %153, %154, %cst_53 {dimension_numbers = #tpu.dot_dimension_numbers<[1], [0], [0], [1], [0, 0, 1, 1], [], []>} : vector<96x32xbf16>, vector<32x256xbf16>, vector<96x256xf32> -> vector<96x256xf32>
    %156 = vector.extract_strided_slice %155 {offsets = [0, 0], sizes = [32, 256], strides = [1, 1]} : vector<96x256xf32> to vector<32x256xf32>
    %157 = vector.extract_strided_slice %155 {offsets = [32, 0], sizes = [32, 256], strides = [1, 1]} : vector<96x256xf32> to vector<32x256xf32>
    %158 = vector.extract_strided_slice %155 {offsets = [64, 0], sizes = [32, 256], strides = [1, 1]} : vector<96x256xf32> to vector<32x256xf32>
    %159 = vector.extract_strided_slice %156 {offsets = [0, 0], sizes = [32, 255], strides = [1, 1]} : vector<32x256xf32> to vector<32x255xf32>
    %160 = tpu.concatenate %2, %159 in 1 : vector<32x1xf32>, vector<32x255xf32> -> vector<32x256xf32>
    %161 = arith.addf %160, %157 : vector<32x256xf32>
    %162 = vector.extract_strided_slice %158 {offsets = [0, 1], sizes = [32, 255], strides = [1, 1]} : vector<32x256xf32> to vector<32x255xf32>
    %163 = tpu.concatenate %162, %2 in 1 : vector<32x255xf32>, vector<32x1xf32> -> vector<32x256xf32>
    %164 = arith.addf %161, %163 : vector<32x256xf32>
    %c7_54 = arith.constant 7 : index
    %c0_55 = arith.constant 0 : index
    %c0_56 = arith.constant 0 : index
    %165 = vector.load %arg3[%c7_54, %c0_55, %c0_56] : memref<9x32x1xf32, #tpu.memory_space<vmem>>, vector<1x32x1xf32>
    %166 = vector.shape_cast %165 : vector<1x32x1xf32> to vector<32x1xf32>
    %167 = vector.broadcast %166 : vector<32x1xf32> to vector<32x256xf32>
    %168 = arith.addf %164, %167 : vector<32x256xf32>
    %169 = vector.broadcast %0 : vector<1x256xf32> to vector<32x256xf32>
    %170 = arith.mulf %168, %169 : vector<32x256xf32>
    %cst_57 = arith.constant 2.000000e-01 : f32
    %171 = vector.broadcast %cst_57 : f32 to vector<32x256xf32>
    %172 = arith.mulf %171, %170 : vector<32x256xf32>
    %173 = arith.maximumf %170, %172 : vector<32x256xf32>
    %c8 = arith.constant 8 : index
    %c0_58 = arith.constant 0 : index
    %c0_59 = arith.constant 0 : index
    %174 = vector.load %arg2[%c8, %c0_58, %c0_59] : memref<9x96x32xbf16, #tpu.memory_space<vmem>>, vector<1x96x32xbf16>
    %175 = vector.shape_cast %174 : vector<1x96x32xbf16> to vector<96x32xbf16>
    %176 = arith.truncf %173 : vector<32x256xf32> to vector<32x256xbf16>
    %cst_60 = arith.constant dense<0.000000e+00> : vector<96x256xf32>
    %177 = tpu.matmul %175, %176, %cst_60 {dimension_numbers = #tpu.dot_dimension_numbers<[1], [0], [0], [1], [0, 0, 1, 1], [], []>} : vector<96x32xbf16>, vector<32x256xbf16>, vector<96x256xf32> -> vector<96x256xf32>
    %178 = vector.extract_strided_slice %177 {offsets = [0, 0], sizes = [32, 256], strides = [1, 1]} : vector<96x256xf32> to vector<32x256xf32>
    %179 = vector.extract_strided_slice %177 {offsets = [32, 0], sizes = [32, 256], strides = [1, 1]} : vector<96x256xf32> to vector<32x256xf32>
    %180 = vector.extract_strided_slice %177 {offsets = [64, 0], sizes = [32, 256], strides = [1, 1]} : vector<96x256xf32> to vector<32x256xf32>
    %181 = vector.extract_strided_slice %178 {offsets = [0, 0], sizes = [32, 255], strides = [1, 1]} : vector<32x256xf32> to vector<32x255xf32>
    %182 = tpu.concatenate %2, %181 in 1 : vector<32x1xf32>, vector<32x255xf32> -> vector<32x256xf32>
    %183 = arith.addf %182, %179 : vector<32x256xf32>
    %184 = vector.extract_strided_slice %180 {offsets = [0, 1], sizes = [32, 255], strides = [1, 1]} : vector<32x256xf32> to vector<32x255xf32>
    %185 = tpu.concatenate %184, %2 in 1 : vector<32x255xf32>, vector<32x1xf32> -> vector<32x256xf32>
    %186 = arith.addf %183, %185 : vector<32x256xf32>
    %c8_61 = arith.constant 8 : index
    %c0_62 = arith.constant 0 : index
    %c0_63 = arith.constant 0 : index
    %187 = vector.load %arg3[%c8_61, %c0_62, %c0_63] : memref<9x32x1xf32, #tpu.memory_space<vmem>>, vector<1x32x1xf32>
    %188 = vector.shape_cast %187 : vector<1x32x1xf32> to vector<32x1xf32>
    %189 = vector.broadcast %188 : vector<32x1xf32> to vector<32x256xf32>
    %190 = arith.addf %186, %189 : vector<32x256xf32>
    %191 = vector.broadcast %0 : vector<1x256xf32> to vector<32x256xf32>
    %192 = arith.mulf %190, %191 : vector<32x256xf32>
    %c0_64 = arith.constant 0 : index
    %c0_65 = arith.constant 0 : index
    %193 = vector.load %arg5[%c0_64, %c0_65] : memref<32x256xf32, #tpu.memory_space<vmem>>, vector<32x256xf32>
    tpu.vector_store %arg5[%c0_64, %c0_65], %192 {strides = array<i32>} : memref<32x256xf32, #tpu.memory_space<vmem>>, vector<32x256xf32>,
    return
  }
  func.func @transform_0(%arg0: i32) -> (i32, i32) {
    %c0_i32 = arith.constant 0 : i32
    %c0_i32_0 = arith.constant 0 : i32
    return %c0_i32, %arg0 : i32, i32
  }
  func.func @transform_1(%arg0: i32) -> (i32, i32, i32) {
    %c0_i32 = arith.constant 0 : i32
    %c0_i32_0 = arith.constant 0 : i32
    %c0_i32_1 = arith.constant 0 : i32
    %c0_i32_2 = arith.constant 0 : i32
    return %c0_i32, %c0_i32_0, %c0_i32_1 : i32, i32, i32
  }
  func.func @transform_2(%arg0: i32) -> (i32, i32, i32) {
    %c0_i32 = arith.constant 0 : i32
    %c0_i32_0 = arith.constant 0 : i32
    %c0_i32_1 = arith.constant 0 : i32
    %c0_i32_2 = arith.constant 0 : i32
    return %c0_i32, %c0_i32_0, %c0_i32_1 : i32, i32, i32
  }
  func.func @transform_3(%arg0: i32) -> (i32, i32) {
    %c0_i32 = arith.constant 0 : i32
    %c0_i32_0 = arith.constant 0 : i32
    %c0_i32_1 = arith.constant 0 : i32
    return %c0_i32, %c0_i32_0 : i32, i32
  }
  func.func @transform_4(%arg0: i32) -> (i32, i32) {
    %c0_i32 = arith.constant 0 : i32
    %c0_i32_0 = arith.constant 0 : i32
    return %c0_i32, %arg0 : i32, i32
  }
}

</mosaic_0001>

<llo_original>
// kernel: tpu_custom_call.1
$region0: #{tpu_custom_call.1}
  #allocation0 [shape = 'u32[]', space=smem, size = 0x4, offset = 0x4, fixed_abs, tag = 'smem constant byte address 0x4 - core index']
  #allocation1 [shape = 'u32[144,128]{1,0:T(1,128)}', space=vmem, size = 0x12000, scoped, tag = 'internal scratch']
  %s0 = inlined_call_operand.vmem [shape: f32[32,256], index: 0, kind: input, shape index: {}]
  %s1 = inlined_call_operand.vmem [shape: bf16[9,96,32], index: 1, kind: input, shape index: {}]
  %s2 = inlined_call_operand.vmem [shape: f32[9,32,1], index: 2, kind: input, shape index: {}]
  %s3 = inlined_call_operand.vmem [shape: f32[1,256], index: 3, kind: input, shape index: {}]
  %s4 = inlined_call_operand.hbm [shape: f32[32,256], index: 4, kind: output, shape index: {}]
  %s5 = sld [smem:[#allocation0]]
  $region26: #{tpu_custom_call.1} parent=0
    _
  %s7 = ssub.s32 1, %s5
  %s8 = scalar_select 0, %s7, %s5
  $region1: #{tpu_custom_call.1} parent=0
    #allocation2 [shape = 'u8[32768]{0}', space=vmem, size = 0x8000, scoped, tag = 'output window, operand 0, single buffered']
    #allocation3 [shape = 's32[1]{0}', space=sflag, size = 0x4, scoped, tag = 'scoped memory for tpu_custom_call.1']
    %9 = vsyncpa [#allocation3], 0
    // Predicated region
    $region2: #{tpu_custom_call.1} parent=1 // pred_check
      _
    $region3: #{tpu_custom_call.1} parent=1 // pred_check_branch
      %11 = sbr.rel (0) target = $region5
    $region4: #{tpu_custom_call.1} parent=1 // pred_region
      _
    $region5: #{tpu_custom_call.1} parent=1 // pred_fallthru
      _
    // Predicated region
    $region6: #{tpu_custom_call.1} parent=1 // pred_check
      _
    $region7: #{tpu_custom_call.1} parent=1 // pred_check_branch
      %13 = sbr.rel (0) target = $region9
    $region8: #{tpu_custom_call.1} parent=1 // pred_region
      _
    $region9: #{tpu_custom_call.1} parent=1 // pred_fallthru
      _
    // Predicated region
    $region10: #{tpu_custom_call.1} parent=1 // pred_check
      _
    $region11: #{tpu_custom_call.1} parent=1 // pred_check_branch
      %15 = sbr.rel (0) target = $region13
    $region12: #{tpu_custom_call.1} parent=1 // pred_region
      _
    $region13: #{tpu_custom_call.1} parent=1 // pred_fallthru
      _
    // Predicated region
    $region14: #{tpu_custom_call.1} parent=1 // pred_check
      _
    $region15: #{tpu_custom_call.1} parent=1 // pred_check_branch
      %17 = sbr.rel (0) target = $region17
    $region16: #{tpu_custom_call.1} parent=1 // pred_region
      _
    $region17: #{tpu_custom_call.1} parent=1 // pred_fallthru
      _
    %v19 = vld [vmem:[%s3] sm:$0x3]
    %v20 = vld [vmem:[%s0] sm:$0xff]
    %v21 = vld [vmem:[%s0 + $0x8] sm:$0xff]
    %v22 = vld [vmem:[%s0 + $0x10] sm:$0xff]
    %v23 = vld [vmem:[%s0 + $0x18] sm:$0xff]
    %v24 = vld [vmem:[%s0 + $0x20] sm:$0xff]
    %v25 = vld [vmem:[%s0 + $0x28] sm:$0xff]
    %v26 = vld [vmem:[%s0 + $0x30] sm:$0xff]
    %v27 = vld [vmem:[%s0 + $0x38] sm:$0xff]
    %v28 = vld [vmem:[%s1] sm:$0xf]
    %v29 = vld [vmem:[%s1 + $0x4] sm:$0xf]
    %v30 = vld [vmem:[%s1 + $0x8] sm:$0xf]
    %v31 = vld [vmem:[%s1 + $0xc] sm:$0xf]
    %v32 = vld [vmem:[%s1 + $0x10] sm:$0xf]
    %v33 = vld [vmem:[%s1 + $0x14] sm:$0xf]
    %v34 = vld [vmem:[%s1 + $0x18] sm:$0xf]
    %v35 = vld [vmem:[%s1 + $0x1c] sm:$0xf]
    %v36 = vld [vmem:[%s1 + $0x20] sm:$0xf]
    %v37 = vld [vmem:[%s1 + $0x24] sm:$0xf]
    %v38 = vld [vmem:[%s1 + $0x28] sm:$0xf]
    %v39 = vld [vmem:[%s1 + $0x2c] sm:$0xf]
    %v40 = vpack.c.bf16 %v22, %v20
    %v41 = vpack.c.bf16 %v23, %v21
    %v42 = vpack.c.bf16 %v26, %v24
    %v43 = vpack.c.bf16 %v27, %v25
    %v56 = vunpack.c.l.b16 %v28
    %v57 = vunpack.c.l.b16 %v29
    %v58 = vunpack.c.l.b16 %v30
    %v59 = vunpack.c.l.b16 %v31
    %v60 = vunpack.c.l.b16 %v32
    %v61 = vunpack.c.l.b16 %v33
    %v62 = vunpack.c.l.b16 %v34
    %v63 = vunpack.c.l.b16 %v35
    %v64 = vunpack.c.l.b16 %v36
    %v65 = vunpack.c.l.b16 %v37
    %v66 = vunpack.c.l.b16 %v38
    %v67 = vunpack.c.l.b16 %v39
    %v68 = vpack.c.b16 %v57, %v56
    %v69 = vpack.c.b16 %v59, %v58
    %v70 = vpack.c.b16 %v61, %v60
    %v71 = vpack.c.b16 %v63, %v62
    %v72 = vpack.c.b16 %v65, %v64
    %v73 = vpack.c.b16 %v67, %v66
    %vm74 = vcmask 261120
    %v76 = vsel %vm74, %v68, 0
    %v79 = vsel %vm74, %v69, 0
    %v82 = vsel %vm74, %v70, 0
    %v85 = vsel %vm74, %v71, 0
    %v88 = vsel %vm74, %v72, 0
    %v91 = vsel %vm74, %v73, 0
    %93 = vmatprep.subr.bf16.mxu0 %v41
    %94 = vmatpush1.bf16.msra.mxu0 %v40
    %95 = vmatprep.subr.bf16.mxu0 %v43
    %96 = vmatpush1.bf16.msra.mxu0 %v42
    %97 = vmatprep.subr.bf16.mxu0 0
    %98 = vmatpush1.bf16.msra.mxu0 0
    %99 = vmatprep.subr.bf16.mxu0 0
    %100 = vmatpush1.bf16.msra.mxu0 0
    %101 = vmatprep.subr.bf16.mxu0 0
    %102 = vmatpush1.bf16.msra.mxu0 0
    %103 = vmatprep.subr.bf16.mxu0 0
    %104 = vmatpush1.bf16.msra.mxu0 0
    %105 = vmatprep.subr.bf16.mxu0 0
    %106 = vmatpush1.bf16.msra.mxu0 0
    %107 = vmatprep.subr.bf16.mxu0 0
    %108 = vmatpush1.bf16.msra.mxu0 0
    %109 = vmatprep.subr.bf16.mxu0 0
    %110 = vmatpush1.bf16.msra.mxu0 0
    %111 = vmatprep.subr.bf16.mxu0 0
    %112 = vmatpush1.bf16.msra.mxu0 0
    %113 = vmatprep.subr.bf16.mxu0 0
    %114 = vmatpush1.bf16.msra.mxu0 0
    %115 = vmatprep.subr.bf16.mxu0 0
    %116 = vmatpush1.bf16.msra.mxu0 0
    %117 = vmatprep.subr.bf16.mxu0 0
    %118 = vmatpush1.bf16.msra.mxu0 0
    %119 = vmatprep.subr.bf16.mxu0 0
    %120 = vmatpush1.bf16.msra.mxu0 0
    %121 = vmatprep.subr.bf16.mxu0 0
    %122 = vmatpush1.bf16.msra.mxu0 0
    %123 = vmatprep.subr.bf16.mxu0 0
    %124 = vmatpush1.bf16.msra.mxu0 0
    %125 = vmatprep.mubr.bf16.mxu0 0
    %126 = vmatmul.mubr.bf16.gmra.mrb[0].mxu0 %v76
    %v127 = vpop.f32.mrb[0].mxu0
    %v128 = vadd.f32 0.0, %v127
    %v129 = vpop.f32.mrb[0].mxu0
    %v130 = vadd.f32 0.0, %v129
    %v131 = vpop.f32.mrb[0].mxu0
    %v132 = vadd.f32 0.0, %v131
    %v133 = vpop.f32.mrb[0].mxu0
    %v134 = vadd.f32 0.0, %v133
    %135 = vmatprep.mubr.bf16.mxu0 0
    %136 = vmatmul.mubr.bf16.gmra.mrb[0].mxu0 %v79
    %v137 = vpop.f32.mrb[0].mxu0
    %v138 = vadd.f32 0.0, %v137
    %v139 = vpop.f32.mrb[0].mxu0
    %v140 = vadd.f32 0.0, %v139
    %v141 = vpop.f32.mrb[0].mxu0
    %v142 = vadd.f32 0.0, %v141
    %v143 = vpop.f32.mrb[0].mxu0
    %v144 = vadd.f32 0.0, %v143
    %145 = vmatprep.mubr.bf16.mxu0 0
    %146 = vmatmul.mubr.bf16.gmra.mrb[0].mxu0 %v82
    %v147 = vpop.f32.mrb[0].mxu0
    %v148 = vadd.f32 0.0, %v147
    %v149 = vpop.f32.mrb[0].mxu0
    %v150 = vadd.f32 0.0, %v149
    %v151 = vpop.f32.mrb[0].mxu0
    %v152 = vadd.f32 0.0, %v151
    %v153 = vpop.f32.mrb[0].mxu0
    %v154 = vadd.f32 0.0, %v153
    %155 = vmatprep.mubr.bf16.mxu0 0
    %156 = vmatmul.mubr.bf16.gmra.mrb[0].mxu0 %v85
    %v157 = vpop.f32.mrb[0].mxu0
    %v158 = vadd.f32 0.0, %v157
    %v159 = vpop.f32.mrb[0].mxu0
    %v160 = vadd.f32 0.0, %v159
    %v161 = vpop.f32.mrb[0].mxu0
    %v162 = vadd.f32 0.0, %v161
    %v163 = vpop.f32.mrb[0].mxu0
    %v164 = vadd.f32 0.0, %v163
    %165 = vmatprep.mubr.bf16.mxu0 0
    %166 = vmatmul.mubr.bf16.gmra.mrb[0].mxu0 %v88
    %v167 = vpop.f32.mrb[0].mxu0
    %v168 = vadd.f32 0.0, %v167
    %v169 = vpop.f32.mrb[0].mxu0
    %v170 = vadd.f32 0.0, %v169
    %v171 = vpop.f32.mrb[0].mxu0
    %v172 = vadd.f32 0.0, %v171
    %v173 = vpop.f32.mrb[0].mxu0
    %v174 = vadd.f32 0.0, %v173
    %175 = vmatprep.mubr.bf16.mxu0 0
    %176 = vmatmul.mubr.bf16.gmra.mrb[0].mxu0 %v91
    %v177 = vpop.f32.mrb[0].mxu0
    %v178 = vadd.f32 0.0, %v177
    %v179 = vpop.f32.mrb[0].mxu0
    %v180 = vadd.f32 0.0, %v179
    %v181 = vpop.f32.mrb[0].mxu0
    %v182 = vadd.f32 0.0, %v181
    %v183 = vpop.f32.mrb[0].mxu0
    %v184 = vadd.f32 0.0, %v183
    %185 = vdwg.mxu0
    %194 = vrot.lane.b32.xlu0 %v128, 1
    %v195 = vpop.permute.xlu0 %194
    %196 = vrot.lane.b32.xlu0 %v130, 1
    %v197 = vpop.permute.xlu0 %196
    %198 = vrot.lane.b32.xlu0 %v132, 1
    %v199 = vpop.permute.xlu0 %198
    %200 = vrot.lane.b32.xlu0 %v134, 1
    %v201 = vpop.permute.xlu0 %200
    %202 = vrot.lane.b32.xlu0 %v138, 1
    %v203 = vpop.permute.xlu0 %202
    %204 = vrot.lane.b32.xlu0 %v140, 1
    %v205 = vpop.permute.xlu0 %204
    %206 = vrot.lane.b32.xlu0 %v142, 1
    %v207 = vpop.permute.xlu0 %206
    %208 = vrot.lane.b32.xlu0 %v144, 1
    %v209 = vpop.permute.xlu0 %208
    %vm210 = vcmask 7168
    %v211 = vsel %vm210, %v195, %v197
    %v212 = vsel %vm210, %v199, %v201
    %v213 = vsel %vm210, %v203, %v205
    %v214 = vsel %vm210, %v207, %v209
    %v223 = vsel %vm210, 0.0, %v195
    %v224 = vsel %vm210, 0.0, %v199
    %v225 = vsel %vm210, 0.0, %v203
    %v226 = vsel %vm210, 0.0, %v207
    %v227 = vadd.f32 %v223, %v148
    %v228 = vadd.f32 %v211, %v150
    %v229 = vadd.f32 %v224, %v152
    %v230 = vadd.f32 %v212, %v154
    %v231 = vadd.f32 %v225, %v158
    %v232 = vadd.f32 %v213, %v160
    %v233 = vadd.f32 %v226, %v162
    %v234 = vadd.f32 %v214, %v164
    %243 = vrot.lane.b32.xlu0 %v168, 127
    %v244 = vpop.permute.xlu0 %243
    %245 = vrot.lane.b32.xlu0 %v170, 127
    %v246 = vpop.permute.xlu0 %245
    %247 = vrot.lane.b32.xlu0 %v172, 127
    %v248 = vpop.permute.xlu0 %247
    %249 = vrot.lane.b32.xlu0 %v174, 127
    %v250 = vpop.permute.xlu0 %249
    %251 = vrot.lane.b32.xlu0 %v178, 127
    %v252 = vpop.permute.xlu0 %251
    %253 = vrot.lane.b32.xlu0 %v180, 127
    %v254 = vpop.permute.xlu0 %253
    %255 = vrot.lane.b32.xlu0 %v182, 127
    %v256 = vpop.permute.xlu0 %255
    %257 = vrot.lane.b32.xlu0 %v184, 127
    %v258 = vpop.permute.xlu0 %257
    %vm259 = vcmask 1039360
    %v260 = vsel %vm259, %v244, %v246
    %v261 = vsel %vm259, %v248, %v250
    %v262 = vsel %vm259, %v252, %v254
    %v263 = vsel %vm259, %v256, %v258
    %v272 = vsel %vm259, %v246, 0.0
    %v273 = vsel %vm259, %v250, 0.0
    %v274 = vsel %vm259, %v254, 0.0
    %v275 = vsel %vm259, %v258, 0.0
    %v276 = vadd.f32 %v227, %v260
    %v277 = vadd.f32 %v228, %v272
    %v278 = vadd.f32 %v229, %v261
    %v279 = vadd.f32 %v230, %v273
    %v280 = vadd.f32 %v231, %v262
    %v281 = vadd.f32 %v232, %v274
    %v282 = vadd.f32 %v233, %v263
    %v283 = vadd.f32 %v234, %v275
    %v284 = vld [vmem:[%s2] sm:$0xff]
    %v285 = vld [vmem:[%s2 + $0x8] sm:$0xff]
    %v286 = vld [vmem:[%s2 + $0x10] sm:$0xff]
    %v287 = vld [vmem:[%s2 + $0x18] sm:$0xff]
    %289 = vset.pattern.permute.xlu0 0
    %290 = vperm.xlu0 %289, %v284
    %v291 = vpop.permute.xlu0 %290
    %294 = vset.pattern.permute.xlu0 0
    %295 = vperm.xlu0 %294, %v285
    %v296 = vpop.permute.xlu0 %295
    %299 = vset.pattern.permute.xlu0 0
    %300 = vperm.xlu0 %299, %v286
    %v301 = vpop.permute.xlu0 %300
    %304 = vset.pattern.permute.xlu0 0
    %305 = vperm.xlu0 %304, %v287
    %v306 = vpop.permute.xlu0 %305
    %v308 = vadd.f32 %v276, %v291
    %v309 = vadd.f32 %v277, %v291
    %v310 = vadd.f32 %v278, %v296
    %v311 = vadd.f32 %v279, %v296
    %v312 = vadd.f32 %v280, %v301
    %v313 = vadd.f32 %v281, %v301
    %v314 = vadd.f32 %v282, %v306
    %v315 = vadd.f32 %v283, %v306
    %v317 = vlaneseq
    %v318 = vshrl.u32 %v317, 7
    %v319 = vsub.s32 0, %v318
    %v320 = vrot.slane %v19, %v319
    %v321 = vlaneseq
    %v322 = vshrl.u32 %v321, 7
    %v323 = vsub.s32 1, %v322
    %v324 = vrot.slane %v19, %v323
    %v327 = vmul.f32 %v308, %v320
    %v328 = vmul.f32 %v309, %v324
    %v329 = vmul.f32 %v310, %v320
    %v330 = vmul.f32 %v311, %v324
    %v331 = vmul.f32 %v312, %v320
    %v332 = vmul.f32 %v313, %v324
    %v333 = vmul.f32 %v314, %v320
    %v334 = vmul.f32 %v315, %v324
    %v335 = vmul.f32 %v327, 0.2
    %v336 = vmul.f32 %v328, 0.2
    %v337 = vmul.f32 %v329, 0.2
    %v338 = vmul.f32 %v330, 0.2
    %v339 = vmul.f32 %v331, 0.2
    %v340 = vmul.f32 %v332, 0.2
    %v341 = vmul.f32 %v333, 0.2
    %v342 = vmul.f32 %v334, 0.2
    %v343 = vmax.f32 %v327, %v335
    %v344 = vmax.f32 %v328, %v336
    %v345 = vmax.f32 %v329, %v337
    %v346 = vmax.f32 %v330, %v338
    %v347 = vmax.f32 %v331, %v339
    %v348 = vmax.f32 %v332, %v340
    %v349 = vmax.f32 %v333, %v341
    %v350 = vmax.f32 %v334, %v342
    %s351 = scalar_lea.vmem %s1, 48
    %v352 = vld [vmem:[%s351] sm:$0xf]
    %v353 = vld [vmem:[%s351 + $0x4] sm:$0xf]
    %v354 = vld [vmem:[%s351 + $0x8] sm:$0xf]
    %v355 = vld [vmem:[%s351 + $0xc] sm:$0xf]
    %v356 = vld [vmem:[%s351 + $0x10] sm:$0xf]
    %v357 = vld [vmem:[%s351 + $0x14] sm:$0xf]
    %v358 = vld [vmem:[%s351 + $0x18] sm:$0xf]
    %v359 = vld [vmem:[%s351 + $0x1c] sm:$0xf]
    %v360 = vld [vmem:[%s351 + $0x20] sm:$0xf]
    %v361 = vld [vmem:[%s351 + $0x24] sm:$0xf]
    %v362 = vld [vmem:[%s351 + $0x28] sm:$0xf]
    %v363 = vld [vmem:[%s351 + $0x2c] sm:$0xf]
    %v364 = vpack.c.bf16 %v345, %v343
    %v365 = vpack.c.bf16 %v346, %v344
    %v366 = vpack.c.bf16 %v349, %v347
    %v367 = vpack.c.bf16 %v350, %v348
    %v380 = vunpack.c.l.b16 %v352
    %v381 = vunpack.c.l.b16 %v353
    %v382 = vunpack.c.l.b16 %v354
    %v383 = vunpack.c.l.b16 %v355
    %v384 = vunpack.c.l.b16 %v356
    %v385 = vunpack.c.l.b16 %v357
    %v386 = vunpack.c.l.b16 %v358
    %v387 = vunpack.c.l.b16 %v359
    %v388 = vunpack.c.l.b16 %v360
    %v389 = vunpack.c.l.b16 %v361
    %v390 = vunpack.c.l.b16 %v362
    %v391 = vunpack.c.l.b16 %v363
    %v392 = vpack.c.b16 %v381, %v380
    %v393 = vpack.c.b16 %v383, %v382
    %v394 = vpack.c.b16 %v385, %v384
    %v395 = vpack.c.b16 %v387, %v386
    %v396 = vpack.c.b16 %v389, %v388
    %v397 = vpack.c.b16 %v391, %v390
    %v399 = vsel %vm74, %v392, 0
    %v402 = vsel %vm74, %v393, 0
    %v405 = vsel %vm74, %v394, 0
    %v408 = vsel %vm74, %v395, 0
    %v411 = vsel %vm74, %v396, 0
    %v414 = vsel %vm74, %v397, 0
    %416 = vmatprep.subr.bf16.mxu0 %v365
    %417 = vmatpush1.bf16.msra.mxu0 %v364
    %418 = vmatprep.subr.bf16.mxu0 %v367
    %419 = vmatpush1.bf16.msra.mxu0 %v366
    %420 = vmatprep.subr.bf16.mxu0 0
    %421 = vmatpush1.bf16.msra.mxu0 0
    %422 = vmatprep.subr.bf16.mxu0 0
    %423 = vmatpush1.bf16.msra.mxu0 0
    %424 = vmatprep.subr.bf16.mxu0 0
    %425 = vmatpush1.bf16.msra.mxu0 0
    %426 = vmatprep.subr.bf16.mxu0 0
    %427 = vmatpush1.bf16.msra.mxu0 0
    %428 = vmatprep.subr.bf16.mxu0 0
    %429 = vmatpush1.bf16.msra.mxu0 0
    %430 = vmatprep.subr.bf16.mxu0 0
    %431 = vmatpush1.bf16.msra.mxu0 0
    %432 = vmatprep.subr.bf16.mxu0 0
    %433 = vmatpush1.bf16.msra.mxu0 0
    %434 = vmatprep.subr.bf16.mxu0 0
    %435 = vmatpush1.bf16.msra.mxu0 0
    %436 = vmatprep.subr.bf16.mxu0 0
    %437 = vmatpush1.bf16.msra.mxu0 0
    %438 = vmatprep.subr.bf16.mxu0 0
    %439 = vmatpush1.bf16.msra.mxu0 0
    %440 = vmatprep.subr.bf16.mxu0 0
    %441 = vmatpush1.bf16.msra.mxu0 0
    %442 = vmatprep.subr.bf16.mxu0 0
    %443 = vmatpush1.bf16.msra.mxu0 0
    %444 = vmatprep.subr.bf16.mxu0 0
    %445 = vmatpush1.bf16.msra.mxu0 0
    %446 = vmatprep.subr.bf16.mxu0 0
    %447 = vmatpush1.bf16.msra.mxu0 0
    %448 = vmatprep.mubr.bf16.mxu0 0
    %449 = vmatmul.mubr.bf16.gmra.mrb[0].mxu0 %v399
    %v450 = vpop.f32.mrb[0].mxu0
    %v451 = vadd.f32 0.0, %v450
    %v452 = vpop.f32.mrb[0].mxu0
    %v453 = vadd.f32 0.0, %v452
    %v454 = vpop.f32.mrb[0].mxu0
    %v455 = vadd.f32 0.0, %v454
    %v456 = vpop.f32.mrb[0].mxu0
    %v457 = vadd.f32 0.0, %v456
    %458 = vmatprep.mubr.bf16.mxu0 0
    %459 = vmatmul.mubr.bf16.gmra.mrb[0].mxu0 %v402
    %v460 = vpop.f32.mrb[0].mxu0
    %v461 = vadd.f32 0.0, %v460
    %v462 = vpop.f32.mrb[0].mxu0
    %v463 = vadd.f32 0.0, %v462
    %v464 = vpop.f32.mrb[0].mxu0
    %v465 = vadd.f32 0.0, %v464
    %v466 = vpop.f32.mrb[0].mxu0
    %v467 = vadd.f32 0.0, %v466
    %468 = vmatprep.mubr.bf16.mxu0 0
    %469 = vmatmul.mubr.bf16.gmra.mrb[0].mxu0 %v405
    %v470 = vpop.f32.mrb[0].mxu0
    %v471 = vadd.f32 0.0, %v470
    %v472 = vpop.f32.mrb[0].mxu0
    %v473 = vadd.f32 0.0, %v472
    %v474 = vpop.f32.mrb[0].mxu0
    %v475 = vadd.f32 0.0, %v474
    %v476 = vpop.f32.mrb[0].mxu0
    %v477 = vadd.f32 0.0, %v476
    %478 = vmatprep.mubr.bf16.mxu0 0
    %479 = vmatmul.mubr.bf16.gmra.mrb[0].mxu0 %v408
    %v480 = vpop.f32.mrb[0].mxu0
    %v481 = vadd.f32 0.0, %v480
    %v482 = vpop.f32.mrb[0].mxu0
    %v483 = vadd.f32 0.0, %v482
    %v484 = vpop.f32.mrb[0].mxu0
    %v485 = vadd.f32 0.0, %v484
    %v486 = vpop.f32.mrb[0].mxu0
    %v487 = vadd.f32 0.0, %v486
    %488 = vmatprep.mubr.bf16.mxu0 0
    %489 = vmatmul.mubr.bf16.gmra.mrb[0].mxu0 %v411
    %v490 = vpop.f32.mrb[0].mxu0
    %v491 = vadd.f32 0.0, %v490
    %v492 = vpop.f32.mrb[0].mxu0
    %v493 = vadd.f32 0.0, %v492
    %v494 = vpop.f32.mrb[0].mxu0
    %v495 = vadd.f32 0.0, %v494
    %v496 = vpop.f32.mrb[0].mxu0
    %v497 = vadd.f32 0.0, %v496
    %498 = vmatprep.mubr.bf16.mxu0 0
    %499 = vmatmul.mubr.bf16.gmra.mrb[0].mxu0 %v414
    %v500 = vpop.f32.mrb[0].mxu0
    %v501 = vadd.f32 0.0, %v500
    %v502 = vpop.f32.mrb[0].mxu0
    %v503 = vadd.f32 0.0, %v502
    %v504 = vpop.f32.mrb[0].mxu0
    %v505 = vadd.f32 0.0, %v504
    %v506 = vpop.f32.mrb[0].mxu0
    %v507 = vadd.f32 0.0, %v506
    %508 = vdwg.mxu0
    %517 = vrot.lane.b32.xlu0 %v451, 1
    %v518 = vpop.permute.xlu0 %517
    %519 = vrot.lane.b32.xlu0 %v453, 1
    %v520 = vpop.permute.xlu0 %519
    %521 = vrot.lane.b32.xlu0 %v455, 1
    %v522 = vpop.permute.xlu0 %521
    %523 = vrot.lane.b32.xlu0 %v457, 1
    %v524 = vpop.permute.xlu0 %523
    %525 = vrot.lane.b32.xlu0 %v461, 1
    %v526 = vpop.permute.xlu0 %525
    %527 = vrot.lane.b32.xlu0 %v463, 1
    %v528 = vpop.permute.xlu0 %527
    %529 = vrot.lane.b32.xlu0 %v465, 1
    %v530 = vpop.permute.xlu0 %529
    %531 = vrot.lane.b32.xlu0 %v467, 1
    %v532 = vpop.permute.xlu0 %531
    %v533 = vsel %vm210, %v518, %v520
    %v534 = vsel %vm210, %v522, %v524
    %v535 = vsel %vm210, %v526, %v528
    %v536 = vsel %vm210, %v530, %v532
    %v545 = vsel %vm210, 0.0, %v518
    %v546 = vsel %vm210, 0.0, %v522
    %v547 = vsel %vm210, 0.0, %v526
    %v548 = vsel %vm210, 0.0, %v530
    %v549 = vadd.f32 %v545, %v471
    %v550 = vadd.f32 %v533, %v473
    %v551 = vadd.f32 %v546, %v475
    %v552 = vadd.f32 %v534, %v477
    %v553 = vadd.f32 %v547, %v481
    %v554 = vadd.f32 %v535, %v483
    %v555 = vadd.f32 %v548, %v485
    %v556 = vadd.f32 %v536, %v487
    %565 = vrot.lane.b32.xlu0 %v491, 127
    %v566 = vpop.permute.xlu0 %565
    %567 = vrot.lane.b32.xlu0 %v493, 127
    %v568 = vpop.permute.xlu0 %567
    %569 = vrot.lane.b32.xlu0 %v495, 127
    %v570 = vpop.permute.xlu0 %569
    %571 = vrot.lane.b32.xlu0 %v497, 127
    %v572 = vpop.permute.xlu0 %571
    %573 = vrot.lane.b32.xlu0 %v501, 127
    %v574 = vpop.permute.xlu0 %573
    %575 = vrot.lane.b32.xlu0 %v503, 127
    %v576 = vpop.permute.xlu0 %575
    %577 = vrot.lane.b32.xlu0 %v505, 127
    %v578 = vpop.permute.xlu0 %577
    %579 = vrot.lane.b32.xlu0 %v507, 127
    %v580 = vpop.permute.xlu0 %579
    %v581 = vsel %vm259, %v566, %v568
    %v582 = vsel %vm259, %v570, %v572
    %v583 = vsel %vm259, %v574, %v576
    %v584 = vsel %vm259, %v578, %v580
    %v593 = vsel %vm259, %v568, 0.0
    %v594 = vsel %vm259, %v572, 0.0
    %v595 = vsel %vm259, %v576, 0.0
    %v596 = vsel %vm259, %v580, 0.0
    %v597 = vadd.f32 %v549, %v581
    %v598 = vadd.f32 %v550, %v593
    %v599 = vadd.f32 %v551, %v582
    %v600 = vadd.f32 %v552, %v594
    %v601 = vadd.f32 %v553, %v583
    %v602 = vadd.f32 %v554, %v595
    %v603 = vadd.f32 %v555, %v584
    %v604 = vadd.f32 %v556, %v596
    %s605 = scalar_lea.vmem %s2, 32
    %v606 = vld [vmem:[%s605] sm:$0xff]
    %v607 = vld [vmem:[%s605 + $0x8] sm:$0xff]
    %v608 = vld [vmem:[%s605 + $0x10] sm:$0xff]
    %v609 = vld [vmem:[%s605 + $0x18] sm:$0xff]
    %611 = vset.pattern.permute.xlu0 0
    %612 = vperm.xlu0 %611, %v606
    %v613 = vpop.permute.xlu0 %612
    %616 = vset.pattern.permute.xlu0 0
    %617 = vperm.xlu0 %616, %v607
    %v618 = vpop.permute.xlu0 %617
    %621 = vset.pattern.permute.xlu0 0
    %622 = vperm.xlu0 %621, %v608
    %v623 = vpop.permute.xlu0 %622
    %626 = vset.pattern.permute.xlu0 0
    %627 = vperm.xlu0 %626, %v609
    %v628 = vpop.permute.xlu0 %627
    %v630 = vadd.f32 %v597, %v613
    %v631 = vadd.f32 %v598, %v613
    %v632 = vadd.f32 %v599, %v618
    %v633 = vadd.f32 %v600, %v618
    %v634 = vadd.f32 %v601, %v623
    %v635 = vadd.f32 %v602, %v623
    %v636 = vadd.f32 %v603, %v628
    %v637 = vadd.f32 %v604, %v628
    %v638 = vmul.f32 %v630, %v320
    %v639 = vmul.f32 %v631, %v324
    %v640 = vmul.f32 %v632, %v320
    %v641 = vmul.f32 %v633, %v324
    %v642 = vmul.f32 %v634, %v320
    %v643 = vmul.f32 %v635, %v324
    %v644 = vmul.f32 %v636, %v320
    %v645 = vmul.f32 %v637, %v324
    %v646 = vmul.f32 %v638, 0.2
    %v647 = vmul.f32 %v639, 0.2
    %v648 = vmul.f32 %v640, 0.2
    %v649 = vmul.f32 %v641, 0.2
    %v650 = vmul.f32 %v642, 0.2
    %v651 = vmul.f32 %v643, 0.2
    %v652 = vmul.f32 %v644, 0.2
    %v653 = vmul.f32 %v645, 0.2
    %v654 = vmax.f32 %v638, %v646
    %v655 = vmax.f32 %v639, %v647
    %v656 = vmax.f32 %v640, %v648
    %v657 = vmax.f32 %v641, %v649
    %v658 = vmax.f32 %v642, %v650
    %v659 = vmax.f32 %v643, %v651
    %v660 = vmax.f32 %v644, %v652
    %v661 = vmax.f32 %v645, %v653
    %s662 = scalar_lea.vmem %s1, 96
    %v663 = vld [vmem:[%s662] sm:$0xf]
    %v664 = vld [vmem:[%s662 + $0x4] sm:$0xf]
    %v665 = vld [vmem:[%s662 + $0x8] sm:$0xf]
    %v666 = vld [vmem:[%s662 + $0xc] sm:$0xf]
    %v667 = vld [vmem:[%s662 + $0x10] sm:$0xf]
    %v668 = vld [vmem:[%s662 + $0x14] sm:$0xf]
    %v669 = vld [vmem:[%s662 + $0x18] sm:$0xf]
    %v670 = vld [vmem:[%s662 + $0x1c] sm:$0xf]
    %v671 = vld [vmem:[%s662 + $0x20] sm:$0xf]
    %v672 = vld [vmem:[%s662 + $0x24] sm:$0xf]
    %v673 = vld [vmem:[%s662 + $0x28] sm:$0xf]
    %v674 = vld [vmem:[%s662 + $0x2c] sm:$0xf]
    %v675 = vpack.c.bf16 %v656, %v654
    %v676 = vpack.c.bf16 %v657, %v655
    %v677 = vpack.c.bf16 %v660, %v658
    %v678 = vpack.c.bf16 %v661, %v659
    %v691 = vunpack.c.l.b16 %v663
    %v692 = vunpack.c.l.b16 %v664
    %v693 = vunpack.c.l.b16 %v665
    %v694 = vunpack.c.l.b16 %v666
    %v695 = vunpack.c.l.b16 %v667
    %v696 = vunpack.c.l.b16 %v668
    %v697 = vunpack.c.l.b16 %v669
    %v698 = vunpack.c.l.b16 %v670
    %v699 = vunpack.c.l.b16 %v671
    %v700 = vunpack.c.l.b16 %v672
    %v701 = vunpack.c.l.b16 %v673
    %v702 = vunpack.c.l.b16 %v674
    %v703 = vpack.c.b16 %v692, %v691
    %v704 = vpack.c.b16 %v694, %v693
    %v705 = vpack.c.b16 %v696, %v695
    %v706 = vpack.c.b16 %v698, %v697
    %v707 = vpack.c.b16 %v700, %v699
    %v708 = vpack.c.b16 %v702, %v701
    %v710 = vsel %vm74, %v703, 0
    %v713 = vsel %vm74, %v704, 0
    %v716 = vsel %vm74, %v705, 0
    %v719 = vsel %vm74, %v706, 0
    %v722 = vsel %vm74, %v707, 0
    %v725 = vsel %vm74, %v708, 0
    %727 = vmatprep.subr.bf16.mxu0 %v676
    %728 = vmatpush1.bf16.msra.mxu0 %v675
    %729 = vmatprep.subr.bf16.mxu0 %v678
    %730 = vmatpush1.bf16.msra.mxu0 %v677
    %731 = vmatprep.subr.bf16.mxu0 0
    %732 = vmatpush1.bf16.msra.mxu0 0
    %733 = vmatprep.subr.bf16.mxu0 0
    %734 = vmatpush1.bf16.msra.mxu0 0
    %735 = vmatprep.subr.bf16.mxu0 0
    %736 = vmatpush1.bf16.msra.mxu0 0
    %737 = vmatprep.subr.bf16.mxu0 0
    %738 = vmatpush1.bf16.msra.mxu0 0
    %739 = vmatprep.subr.bf16.mxu0 0
    %740 = vmatpush1.bf16.msra.mxu0 0
    %741 = vmatprep.subr.bf16.mxu0 0
    %742 = vmatpush1.bf16.msra.mxu0 0
    %743 = vmatprep.subr.bf16.mxu0 0
    %744 = vmatpush1.bf16.msra.mxu0 0
    %745 = vmatprep.subr.bf16.mxu0 0
    %746 = vmatpush1.bf16.msra.mxu0 0
    %747 = vmatprep.subr.bf16.mxu0 0
    %748 = vmatpush1.bf16.msra.mxu0 0
    %749 = vmatprep.subr.bf16.mxu0 0
    %750 = vmatpush1.bf16.msra.mxu0 0
    %751 = vmatprep.subr.bf16.mxu0 0
    %752 = vmatpush1.bf16.msra.mxu0 0
    %753 = vmatprep.subr.bf16.mxu0 0
    %754 = vmatpush1.bf16.msra.mxu0 0
    %755 = vmatprep.subr.bf16.mxu0 0
    %756 = vmatpush1.bf16.msra.mxu0 0
    %757 = vmatprep.subr.bf16.mxu0 0
    %758 = vmatpush1.bf16.msra.mxu0 0
    %759 = vmatprep.mubr.bf16.mxu0 0
    %760 = vmatmul.mubr.bf16.gmra.mrb[0].mxu0 %v710
    %v761 = vpop.f32.mrb[0].mxu0
    %v762 = vadd.f32 0.0, %v761
    %v763 = vpop.f32.mrb[0].mxu0
    %v764 = vadd.f32 0.0, %v763
    %v765 = vpop.f32.mrb[0].mxu0
    %v766 = vadd.f32 0.0, %v765
    %v767 = vpop.f32.mrb[0].mxu0
    %v768 = vadd.f32 0.0, %v767
    %769 = vmatprep.mubr.bf16.mxu0 0
    %770 = vmatmul.mubr.bf16.gmra.mrb[0].mxu0 %v713
    %v771 = vpop.f32.mrb[0].mxu0
    %v772 = vadd.f32 0.0, %v771
    %v773 = vpop.f32.mrb[0].mxu0
    %v774 = vadd.f32 0.0, %v773
    %v775 = vpop.f32.mrb[0].mxu0
    %v776 = vadd.f32 0.0, %v775
    %v777 = vpop.f32.mrb[0].mxu0
    %v778 = vadd.f32 0.0, %v777
    %779 = vmatprep.mubr.bf16.mxu0 0
    %780 = vmatmul.mubr.bf16.gmra.mrb[0].mxu0 %v716
    %v781 = vpop.f32.mrb[0].mxu0
    %v782 = vadd.f32 0.0, %v781
    %v783 = vpop.f32.mrb[0].mxu0
    %v784 = vadd.f32 0.0, %v783
    %v785 = vpop.f32.mrb[0].mxu0
    %v786 = vadd.f32 0.0, %v785
    %v787 = vpop.f32.mrb[0].mxu0
    %v788 = vadd.f32 0.0, %v787
    %789 = vmatprep.mubr.bf16.mxu0 0
    %790 = vmatmul.mubr.bf16.gmra.mrb[0].mxu0 %v719
    %v791 = vpop.f32.mrb[0].mxu0
    %v792 = vadd.f32 0.0, %v791
    %v793 = vpop.f32.mrb[0].mxu0
    %v794 = vadd.f32 0.0, %v793
    %v795 = vpop.f32.mrb[0].mxu0
    %v796 = vadd.f32 0.0, %v795
    %v797 = vpop.f32.mrb[0].mxu0
    %v798 = vadd.f32 0.0, %v797
    %799 = vmatprep.mubr.bf16.mxu0 0
    %800 = vmatmul.mubr.bf16.gmra.mrb[0].mxu0 %v722
    %v801 = vpop.f32.mrb[0].mxu0
    %v802 = vadd.f32 0.0, %v801
    %v803 = vpop.f32.mrb[0].mxu0
    %v804 = vadd.f32 0.0, %v803
    %v805 = vpop.f32.mrb[0].mxu0
    %v806 = vadd.f32 0.0, %v805
    %v807 = vpop.f32.mrb[0].mxu0
    %v808 = vadd.f32 0.0, %v807
    %809 = vmatprep.mubr.bf16.mxu0 0
    %810 = vmatmul.mubr.bf16.gmra.mrb[0].mxu0 %v725
    %v811 = vpop.f32.mrb[0].mxu0
    %v812 = vadd.f32 0.0, %v811
    %v813 = vpop.f32.mrb[0].mxu0
    %v814 = vadd.f32 0.0, %v813
    %v815 = vpop.f32.mrb[0].mxu0
    %v816 = vadd.f32 0.0, %v815
    %v817 = vpop.f32.mrb[0].mxu0
    %v818 = vadd.f32 0.0, %v817
    %819 = vdwg.mxu0
    %828 = vrot.lane.b32.xlu0 %v762, 1
    %v829 = vpop.permute.xlu0 %828
    %830 = vrot.lane.b32.xlu0 %v764, 1
    %v831 = vpop.permute.xlu0 %830
    %832 = vrot.lane.b32.xlu0 %v766, 1
    %v833 = vpop.permute.xlu0 %832
    %834 = vrot.lane.b32.xlu0 %v768, 1
    %v835 = vpop.permute.xlu0 %834
    %836 = vrot.lane.b32.xlu0 %v772, 1
    %v837 = vpop.permute.xlu0 %836
    %838 = vrot.lane.b32.xlu0 %v774, 1
    %v839 = vpop.permute.xlu0 %838
    %840 = vrot.lane.b32.xlu0 %v776, 1
    %v841 = vpop.permute.xlu0 %840
    %842 = vrot.lane.b32.xlu0 %v778, 1
    %v843 = vpop.permute.xlu0 %842
    %v844 = vsel %vm210, %v829, %v831
    %v845 = vsel %vm210, %v833, %v835
    %v846 = vsel %vm210, %v837, %v839
    %v847 = vsel %vm210, %v841, %v843
    %v856 = vsel %vm210, 0.0, %v829
    %v857 = vsel %vm210, 0.0, %v833
    %v858 = vsel %vm210, 0.0, %v837
    %v859 = vsel %vm210, 0.0, %v841
    %v860 = vadd.f32 %v856, %v782
    %v861 = vadd.f32 %v844, %v784
    %v862 = vadd.f32 %v857, %v786
    %v863 = vadd.f32 %v845, %v788
    %v864 = vadd.f32 %v858, %v792
    %v865 = vadd.f32 %v846, %v794
    %v866 = vadd.f32 %v859, %v796
    %v867 = vadd.f32 %v847, %v798
    %876 = vrot.lane.b32.xlu0 %v802, 127
    %v877 = vpop.permute.xlu0 %876
    %878 = vrot.lane.b32.xlu0 %v804, 127
    %v879 = vpop.permute.xlu0 %878
    %880 = vrot.lane.b32.xlu0 %v806, 127
    %v881 = vpop.permute.xlu0 %880
    %882 = vrot.lane.b32.xlu0 %v808, 127
    %v883 = vpop.permute.xlu0 %882
    %884 = vrot.lane.b32.xlu0 %v812, 127
    %v885 = vpop.permute.xlu0 %884
    %886 = vrot.lane.b32.xlu0 %v814, 127
    %v887 = vpop.permute.xlu0 %886
    %888 = vrot.lane.b32.xlu0 %v816, 127
    %v889 = vpop.permute.xlu0 %888
    %890 = vrot.lane.b32.xlu0 %v818, 127
    %v891 = vpop.permute.xlu0 %890
    %v892 = vsel %vm259, %v877, %v879
    %v893 = vsel %vm259, %v881, %v883
    %v894 = vsel %vm259, %v885, %v887
    %v895 = vsel %vm259, %v889, %v891
    %v904 = vsel %vm259, %v879, 0.0
    %v905 = vsel %vm259, %v883, 0.0
    %v906 = vsel %vm259, %v887, 0.0
    %v907 = vsel %vm259, %v891, 0.0
    %v908 = vadd.f32 %v860, %v892
    %v909 = vadd.f32 %v861, %v904
    %v910 = vadd.f32 %v862, %v893
    %v911 = vadd.f32 %v863, %v905
    %v912 = vadd.f32 %v864, %v894
    %v913 = vadd.f32 %v865, %v906
    %v914 = vadd.f32 %v866, %v895
    %v915 = vadd.f32 %v867, %v907
    %s916 = scalar_lea.vmem %s2, 64
    %v917 = vld [vmem:[%s916] sm:$0xff]
    %v918 = vld [vmem:[%s916 + $0x8] sm:$0xff]
    %v919 = vld [vmem:[%s916 + $0x10] sm:$0xff]
    %v920 = vld [vmem:[%s916 + $0x18] sm:$0xff]
    %922 = vset.pattern.permute.xlu0 0
    %923 = vperm.xlu0 %922, %v917
    %v924 = vpop.permute.xlu0 %923
    %927 = vset.pattern.permute.xlu0 0
    %928 = vperm.xlu0 %927, %v918
    %v929 = vpop.permute.xlu0 %928
    %932 = vset.pattern.permute.xlu0 0
    %933 = vperm.xlu0 %932, %v919
    %v934 = vpop.permute.xlu0 %933
    %937 = vset.pattern.permute.xlu0 0
    %938 = vperm.xlu0 %937, %v920
    %v939 = vpop.permute.xlu0 %938
    %v941 = vadd.f32 %v908, %v924
    %v942 = vadd.f32 %v909, %v924
    %v943 = vadd.f32 %v910, %v929
    %v944 = vadd.f32 %v911, %v929
    %v945 = vadd.f32 %v912, %v934
    %v946 = vadd.f32 %v913, %v934
    %v947 = vadd.f32 %v914, %v939
    %v948 = vadd.f32 %v915, %v939
    %v949 = vmul.f32 %v941, %v320
    %v950 = vmul.f32 %v942, %v324
    %v951 = vmul.f32 %v943, %v320
    %v952 = vmul.f32 %v944, %v324
    %v953 = vmul.f32 %v945, %v320
    %v954 = vmul.f32 %v946, %v324
    %v955 = vmul.f32 %v947, %v320
    %v956 = vmul.f32 %v948, %v324
    %s957 = scalar_lea.vmem %s1, 144
    %v958 = vld [vmem:[%s957] sm:$0xf]
    %v959 = vld [vmem:[%s957 + $0x4] sm:$0xf]
    %v960 = vld [vmem:[%s957 + $0x8] sm:$0xf]
    %v961 = vld [vmem:[%s957 + $0xc] sm:$0xf]
    %v962 = vld [vmem:[%s957 + $0x10] sm:$0xf]
    %v963 = vld [vmem:[%s957 + $0x14] sm:$0xf]
    %v964 = vld [vmem:[%s957 + $0x18] sm:$0xf]
    %v965 = vld [vmem:[%s957 + $0x1c] sm:$0xf]
    %v966 = vld [vmem:[%s957 + $0x20] sm:$0xf]
    %v967 = vld [vmem:[%s957 + $0x24] sm:$0xf]
    %v968 = vld [vmem:[%s957 + $0x28] sm:$0xf]
    %v969 = vld [vmem:[%s957 + $0x2c] sm:$0xf]
    %v970 = vpack.c.bf16 %v951, %v949
    %v971 = vpack.c.bf16 %v952, %v950
    %v972 = vpack.c.bf16 %v955, %v953
    %v973 = vpack.c.bf16 %v956, %v954
    %v986 = vunpack.c.l.b16 %v958
    %v987 = vunpack.c.l.b16 %v959
    %v988 = vunpack.c.l.b16 %v960
    %v989 = vunpack.c.l.b16 %v961
    %v990 = vunpack.c.l.b16 %v962
    %v991 = vunpack.c.l.b16 %v963
    %v992 = vunpack.c.l.b16 %v964
    %v993 = vunpack.c.l.b16 %v965
    %v994 = vunpack.c.l.b16 %v966
    %v995 = vunpack.c.l.b16 %v967
    %v996 = vunpack.c.l.b16 %v968
    %v997 = vunpack.c.l.b16 %v969
    %v998 = vpack.c.b16 %v987, %v986
    %v999 = vpack.c.b16 %v989, %v988
    %v1000 = vpack.c.b16 %v991, %v990
    %v1001 = vpack.c.b16 %v993, %v992
    %v1002 = vpack.c.b16 %v995, %v994
    %v1003 = vpack.c.b16 %v997, %v996
    %v1005 = vsel %vm74, %v998, 0
    %v1008 = vsel %vm74, %v999, 0
    %v1011 = vsel %vm74, %v1000, 0
    %v1014 = vsel %vm74, %v1001, 0
    %v1017 = vsel %vm74, %v1002, 0
    %v1020 = vsel %vm74, %v1003, 0
    %1022 = vmatprep.subr.bf16.mxu0 %v971
    %1023 = vmatpush1.bf16.msra.mxu0 %v970
    %1024 = vmatprep.subr.bf16.mxu0 %v973
    %1025 = vmatpush1.bf16.msra.mxu0 %v972
    %1026 = vmatprep.subr.bf16.mxu0 0
    %1027 = vmatpush1.bf16.msra.mxu0 0
    %1028 = vmatprep.subr.bf16.mxu0 0
    %1029 = vmatpush1.bf16.msra.mxu0 0
    %1030 = vmatprep.subr.bf16.mxu0 0
    %1031 = vmatpush1.bf16.msra.mxu0 0
    %1032 = vmatprep.subr.bf16.mxu0 0
    %1033 = vmatpush1.bf16.msra.mxu0 0
    %1034 = vmatprep.subr.bf16.mxu0 0
    %1035 = vmatpush1.bf16.msra.mxu0 0
    %1036 = vmatprep.subr.bf16.mxu0 0
    %1037 = vmatpush1.bf16.msra.mxu0 0
    %1038 = vmatprep.subr.bf16.mxu0 0
    %1039 = vmatpush1.bf16.msra.mxu0 0
    %1040 = vmatprep.subr.bf16.mxu0 0
    %1041 = vmatpush1.bf16.msra.mxu0 0
    %1042 = vmatprep.subr.bf16.mxu0 0
    %1043 = vmatpush1.bf16.msra.mxu0 0
    %1044 = vmatprep.subr.bf16.mxu0 0
    %1045 = vmatpush1.bf16.msra.mxu0 0
    %1046 = vmatprep.subr.bf16.mxu0 0
    %1047 = vmatpush1.bf16.msra.mxu0 0
    %1048 = vmatprep.subr.bf16.mxu0 0
    %1049 = vmatpush1.bf16.msra.mxu0 0
    %1050 = vmatprep.subr.bf16.mxu0 0
    %1051 = vmatpush1.bf16.msra.mxu0 0
    %1052 = vmatprep.subr.bf16.mxu0 0
    %1053 = vmatpush1.bf16.msra.mxu0 0
    %1054 = vmatprep.mubr.bf16.mxu0 0
    %1055 = vmatmul.mubr.bf16.gmra.mrb[0].mxu0 %v1005
    %v1056 = vpop.f32.mrb[0].mxu0
    %v1057 = vadd.f32 0.0, %v1056
    %v1058 = vpop.f32.mrb[0].mxu0
    %v1059 = vadd.f32 0.0, %v1058
    %v1060 = vpop.f32.mrb[0].mxu0
    %v1061 = vadd.f32 0.0, %v1060
    %v1062 = vpop.f32.mrb[0].mxu0
    %v1063 = vadd.f32 0.0, %v1062
    %1064 = vmatprep.mubr.bf16.mxu0 0
    %1065 = vmatmul.mubr.bf16.gmra.mrb[0].mxu0 %v1008
    %v1066 = vpop.f32.mrb[0].mxu0
    %v1067 = vadd.f32 0.0, %v1066
    %v1068 = vpop.f32.mrb[0].mxu0
    %v1069 = vadd.f32 0.0, %v1068
    %v1070 = vpop.f32.mrb[0].mxu0
    %v1071 = vadd.f32 0.0, %v1070
    %v1072 = vpop.f32.mrb[0].mxu0
    %v1073 = vadd.f32 0.0, %v1072
    %1074 = vmatprep.mubr.bf16.mxu0 0
    %1075 = vmatmul.mubr.bf16.gmra.mrb[0].mxu0 %v1011
    %v1076 = vpop.f32.mrb[0].mxu0
    %v1077 = vadd.f32 0.0, %v1076
    %v1078 = vpop.f32.mrb[0].mxu0
    %v1079 = vadd.f32 0.0, %v1078
    %v1080 = vpop.f32.mrb[0].mxu0
    %v1081 = vadd.f32 0.0, %v1080
    %v1082 = vpop.f32.mrb[0].mxu0
    %v1083 = vadd.f32 0.0, %v1082
    %1084 = vmatprep.mubr.bf16.mxu0 0
    %1085 = vmatmul.mubr.bf16.gmra.mrb[0].mxu0 %v1014
    %v1086 = vpop.f32.mrb[0].mxu0
    %v1087 = vadd.f32 0.0, %v1086
    %v1088 = vpop.f32.mrb[0].mxu0
    %v1089 = vadd.f32 0.0, %v1088
    %v1090 = vpop.f32.mrb[0].mxu0
    %v1091 = vadd.f32 0.0, %v1090
    %v1092 = vpop.f32.mrb[0].mxu0
    %v1093 = vadd.f32 0.0, %v1092
    %1094 = vmatprep.mubr.bf16.mxu0 0
    %1095 = vmatmul.mubr.bf16.gmra.mrb[0].mxu0 %v1017
    %v1096 = vpop.f32.mrb[0].mxu0
    %v1097 = vadd.f32 0.0, %v1096
    %v1098 = vpop.f32.mrb[0].mxu0
    %v1099 = vadd.f32 0.0, %v1098
    %v1100 = vpop.f32.mrb[0].mxu0
    %v1101 = vadd.f32 0.0, %v1100
    %v1102 = vpop.f32.mrb[0].mxu0
    %v1103 = vadd.f32 0.0, %v1102
    %1104 = vmatprep.mubr.bf16.mxu0 0
    %1105 = vmatmul.mubr.bf16.gmra.mrb[0].mxu0 %v1020
    %v1106 = vpop.f32.mrb[0].mxu0
    %v1107 = vadd.f32 0.0, %v1106
    %v1108 = vpop.f32.mrb[0].mxu0
    %v1109 = vadd.f32 0.0, %v1108
    %v1110 = vpop.f32.mrb[0].mxu0
    %v1111 = vadd.f32 0.0, %v1110
    %v1112 = vpop.f32.mrb[0].mxu0
    %v1113 = vadd.f32 0.0, %v1112
    %1114 = vdwg.mxu0
    %1123 = vrot.lane.b32.xlu0 %v1057, 1
    %v1124 = vpop.permute.xlu0 %1123
    %1125 = vrot.lane.b32.xlu0 %v1059, 1
    %v1126 = vpop.permute.xlu0 %1125
    %1127 = vrot.lane.b32.xlu0 %v1061, 1
    %v1128 = vpop.permute.xlu0 %1127
    %1129 = vrot.lane.b32.xlu0 %v1063, 1
    %v1130 = vpop.permute.xlu0 %1129
    %1131 = vrot.lane.b32.xlu0 %v1067, 1
    %v1132 = vpop.permute.xlu0 %1131
    %1133 = vrot.lane.b32.xlu0 %v1069, 1
    %v1134 = vpop.permute.xlu0 %1133
    %1135 = vrot.lane.b32.xlu0 %v1071, 1
    %v1136 = vpop.permute.xlu0 %1135
    %1137 = vrot.lane.b32.xlu0 %v1073, 1
    %v1138 = vpop.permute.xlu0 %1137
    %v1139 = vsel %vm210, %v1124, %v1126
    %v1140 = vsel %vm210, %v1128, %v1130
    %v1141 = vsel %vm210, %v1132, %v1134
    %v1142 = vsel %vm210, %v1136, %v1138
    %v1151 = vsel %vm210, 0.0, %v1124
    %v1152 = vsel %vm210, 0.0, %v1128
    %v1153 = vsel %vm210, 0.0, %v1132
    %v1154 = vsel %vm210, 0.0, %v1136
    %v1155 = vadd.f32 %v1151, %v1077
    %v1156 = vadd.f32 %v1139, %v1079
    %v1157 = vadd.f32 %v1152, %v1081
    %v1158 = vadd.f32 %v1140, %v1083
    %v1159 = vadd.f32 %v1153, %v1087
    %v1160 = vadd.f32 %v1141, %v1089
    %v1161 = vadd.f32 %v1154, %v1091
    %v1162 = vadd.f32 %v1142, %v1093
    %1171 = vrot.lane.b32.xlu0 %v1097, 127
    %v1172 = vpop.permute.xlu0 %1171
    %1173 = vrot.lane.b32.xlu0 %v1099, 127
    %v1174 = vpop.permute.xlu0 %1173
    %1175 = vrot.lane.b32.xlu0 %v1101, 127
    %v1176 = vpop.permute.xlu0 %1175
    %1177 = vrot.lane.b32.xlu0 %v1103, 127
    %v1178 = vpop.permute.xlu0 %1177
    %1179 = vrot.lane.b32.xlu0 %v1107, 127
    %v1180 = vpop.permute.xlu0 %1179
    %1181 = vrot.lane.b32.xlu0 %v1109, 127
    %v1182 = vpop.permute.xlu0 %1181
    %1183 = vrot.lane.b32.xlu0 %v1111, 127
    %v1184 = vpop.permute.xlu0 %1183
    %1185 = vrot.lane.b32.xlu0 %v1113, 127
    %v1186 = vpop.permute.xlu0 %1185
    %v1187 = vsel %vm259, %v1172, %v1174
    %v1188 = vsel %vm259, %v1176, %v1178
    %v1189 = vsel %vm259, %v1180, %v1182
    %v1190 = vsel %vm259, %v1184, %v1186
    %v1199 = vsel %vm259, %v1174, 0.0
    %v1200 = vsel %vm259, %v1178, 0.0
    %v1201 = vsel %vm259, %v1182, 0.0
    %v1202 = vsel %vm259, %v1186, 0.0
    %v1203 = vadd.f32 %v1155, %v1187
    %v1204 = vadd.f32 %v1156, %v1199
    %v1205 = vadd.f32 %v1157, %v1188
    %v1206 = vadd.f32 %v1158, %v1200
    %v1207 = vadd.f32 %v1159, %v1189
    %v1208 = vadd.f32 %v1160, %v1201
    %v1209 = vadd.f32 %v1161, %v1190
    %v1210 = vadd.f32 %v1162, %v1202
    %s1211 = scalar_lea.vmem %s2, 96
    %v1212 = vld [vmem:[%s1211] sm:$0xff]
    %v1213 = vld [vmem:[%s1211 + $0x8] sm:$0xff]
    %v1214 = vld [vmem:[%s1211 + $0x10] sm:$0xff]
    %v1215 = vld [vmem:[%s1211 + $0x18] sm:$0xff]
    %1217 = vset.pattern.permute.xlu0 0
    %1218 = vperm.xlu0 %1217, %v1212
    %v1219 = vpop.permute.xlu0 %1218
    %1222 = vset.pattern.permute.xlu0 0
    %1223 = vperm.xlu0 %1222, %v1213
    %v1224 = vpop.permute.xlu0 %1223
    %1227 = vset.pattern.permute.xlu0 0
    %1228 = vperm.xlu0 %1227, %v1214
    %v1229 = vpop.permute.xlu0 %1228
    %1232 = vset.pattern.permute.xlu0 0
    %1233 = vperm.xlu0 %1232, %v1215
    %v1234 = vpop.permute.xlu0 %1233
    %v1236 = vadd.f32 %v1203, %v1219
    %v1237 = vadd.f32 %v1204, %v1219
    %v1238 = vadd.f32 %v1205, %v1224
    %v1239 = vadd.f32 %v1206, %v1224
    %v1240 = vadd.f32 %v1207, %v1229
    %v1241 = vadd.f32 %v1208, %v1229
    %v1242 = vadd.f32 %v1209, %v1234
    %v1243 = vadd.f32 %v1210, %v1234
    %v1244 = vmul.f32 %v1236, %v320
    %v1245 = vmul.f32 %v1237, %v324
    %v1246 = vmul.f32 %v1238, %v320
    %v1247 = vmul.f32 %v1239, %v324
    %v1248 = vmul.f32 %v1240, %v320
    %v1249 = vmul.f32 %v1241, %v324
    %v1250 = vmul.f32 %v1242, %v320
    %v1251 = vmul.f32 %v1243, %v324
    %v1252 = vmul.f32 %v1244, 0.2
    %v1253 = vmul.f32 %v1245, 0.2
    %v1254 = vmul.f32 %v1246, 0.2
    %v1255 = vmul.f32 %v1247, 0.2
    %v1256 = vmul.f32 %v1248, 0.2
    %v1257 = vmul.f32 %v1249, 0.2
    %v1258 = vmul.f32 %v1250, 0.2
    %v1259 = vmul.f32 %v1251, 0.2
    %v1260 = vmax.f32 %v1244, %v1252
    %v1261 = vmax.f32 %v1245, %v1253
    %v1262 = vmax.f32 %v1246, %v1254
    %v1263 = vmax.f32 %v1247, %v1255
    %v1264 = vmax.f32 %v1248, %v1256
    %v1265 = vmax.f32 %v1249, %v1257
    %v1266 = vmax.f32 %v1250, %v1258
    %v1267 = vmax.f32 %v1251, %v1259
    %s1268 = scalar_lea.vmem %s1, 192
    %v1269 = vld [vmem:[%s1268] sm:$0xf]
    %v1270 = vld [vmem:[%s1268 + $0x4] sm:$0xf]
    %v1271 = vld [vmem:[%s1268 + $0x8] sm:$0xf]
    %v1272 = vld [vmem:[%s1268 + $0xc] sm:$0xf]
    %v1273 = vld [vmem:[%s1268 + $0x10] sm:$0xf]
    %v1274 = vld [vmem:[%s1268 + $0x14] sm:$0xf]
    %v1275 = vld [vmem:[%s1268 + $0x18] sm:$0xf]
    %v1276 = vld [vmem:[%s1268 + $0x1c] sm:$0xf]
    %v1277 = vld [vmem:[%s1268 + $0x20] sm:$0xf]
    %v1278 = vld [vmem:[%s1268 + $0x24] sm:$0xf]
    %v1279 = vld [vmem:[%s1268 + $0x28] sm:$0xf]
    %v1280 = vld [vmem:[%s1268 + $0x2c] sm:$0xf]
    %v1281 = vpack.c.bf16 %v1262, %v1260
    %v1282 = vpack.c.bf16 %v1263, %v1261
    %v1283 = vpack.c.bf16 %v1266, %v1264
    %v1284 = vpack.c.bf16 %v1267, %v1265
    %v1297 = vunpack.c.l.b16 %v1269
    %v1298 = vunpack.c.l.b16 %v1270
    %v1299 = vunpack.c.l.b16 %v1271
    %v1300 = vunpack.c.l.b16 %v1272
    %v1301 = vunpack.c.l.b16 %v1273
    %v1302 = vunpack.c.l.b16 %v1274
    %v1303 = vunpack.c.l.b16 %v1275
    %v1304 = vunpack.c.l.b16 %v1276
    %v1305 = vunpack.c.l.b16 %v1277
    %v1306 = vunpack.c.l.b16 %v1278
    %v1307 = vunpack.c.l.b16 %v1279
    %v1308 = vunpack.c.l.b16 %v1280
    %v1309 = vpack.c.b16 %v1298, %v1297
    %v1310 = vpack.c.b16 %v1300, %v1299
    %v1311 = vpack.c.b16 %v1302, %v1301
    %v1312 = vpack.c.b16 %v1304, %v1303
    %v1313 = vpack.c.b16 %v1306, %v1305
    %v1314 = vpack.c.b16 %v1308, %v1307
    %v1316 = vsel %vm74, %v1309, 0
    %v1319 = vsel %vm74, %v1310, 0
    %v1322 = vsel %vm74, %v1311, 0
    %v1325 = vsel %vm74, %v1312, 0
    %v1328 = vsel %vm74, %v1313, 0
    %v1331 = vsel %vm74, %v1314, 0
    %1333 = vmatprep.subr.bf16.mxu0 %v1282
    %1334 = vmatpush1.bf16.msra.mxu0 %v1281
    %1335 = vmatprep.subr.bf16.mxu0 %v1284
    %1336 = vmatpush1.bf16.msra.mxu0 %v1283
    %1337 = vmatprep.subr.bf16.mxu0 0
    %1338 = vmatpush1.bf16.msra.mxu0 0
    %1339 = vmatprep.subr.bf16.mxu0 0
    %1340 = vmatpush1.bf16.msra.mxu0 0
    %1341 = vmatprep.subr.bf16.mxu0 0
    %1342 = vmatpush1.bf16.msra.mxu0 0
    %1343 = vmatprep.subr.bf16.mxu0 0
    %1344 = vmatpush1.bf16.msra.mxu0 0
    %1345 = vmatprep.subr.bf16.mxu0 0
    %1346 = vmatpush1.bf16.msra.mxu0 0
    %1347 = vmatprep.subr.bf16.mxu0 0
    %1348 = vmatpush1.bf16.msra.mxu0 0
    %1349 = vmatprep.subr.bf16.mxu0 0
    %1350 = vmatpush1.bf16.msra.mxu0 0
    %1351 = vmatprep.subr.bf16.mxu0 0
    %1352 = vmatpush1.bf16.msra.mxu0 0
    %1353 = vmatprep.subr.bf16.mxu0 0
    %1354 = vmatpush1.bf16.msra.mxu0 0
    %1355 = vmatprep.subr.bf16.mxu0 0
    %1356 = vmatpush1.bf16.msra.mxu0 0
    %1357 = vmatprep.subr.bf16.mxu0 0
    %1358 = vmatpush1.bf16.msra.mxu0 0
    %1359 = vmatprep.subr.bf16.mxu0 0
    %1360 = vmatpush1.bf16.msra.mxu0 0
    %1361 = vmatprep.subr.bf16.mxu0 0
    %1362 = vmatpush1.bf16.msra.mxu0 0
    %1363 = vmatprep.subr.bf16.mxu0 0
    %1364 = vmatpush1.bf16.msra.mxu0 0
    %1365 = vmatprep.mubr.bf16.mxu0 0
    %1366 = vmatmul.mubr.bf16.gmra.mrb[0].mxu0 %v1316
    %v1367 = vpop.f32.mrb[0].mxu0
    %v1368 = vadd.f32 0.0, %v1367
    %v1369 = vpop.f32.mrb[0].mxu0
    %v1370 = vadd.f32 0.0, %v1369
    %v1371 = vpop.f32.mrb[0].mxu0
    %v1372 = vadd.f32 0.0, %v1371
    %v1373 = vpop.f32.mrb[0].mxu0
    %v1374 = vadd.f32 0.0, %v1373
    %1375 = vmatprep.mubr.bf16.mxu0 0
    %1376 = vmatmul.mubr.bf16.gmra.mrb[0].mxu0 %v1319
    %v1377 = vpop.f32.mrb[0].mxu0
    %v1378 = vadd.f32 0.0, %v1377
    %v1379 = vpop.f32.mrb[0].mxu0
    %v1380 = vadd.f32 0.0, %v1379
    %v1381 = vpop.f32.mrb[0].mxu0
    %v1382 = vadd.f32 0.0, %v1381
    %v1383 = vpop.f32.mrb[0].mxu0
    %v1384 = vadd.f32 0.0, %v1383
    %1385 = vmatprep.mubr.bf16.mxu0 0
    %1386 = vmatmul.mubr.bf16.gmra.mrb[0].mxu0 %v1322
    %v1387 = vpop.f32.mrb[0].mxu0
    %v1388 = vadd.f32 0.0, %v1387
    %v1389 = vpop.f32.mrb[0].mxu0
    %v1390 = vadd.f32 0.0, %v1389
    %v1391 = vpop.f32.mrb[0].mxu0
    %v1392 = vadd.f32 0.0, %v1391
    %v1393 = vpop.f32.mrb[0].mxu0
    %v1394 = vadd.f32 0.0, %v1393
    %1395 = vmatprep.mubr.bf16.mxu0 0
    %1396 = vmatmul.mubr.bf16.gmra.mrb[0].mxu0 %v1325
    %v1397 = vpop.f32.mrb[0].mxu0
    %v1398 = vadd.f32 0.0, %v1397
    %v1399 = vpop.f32.mrb[0].mxu0
    %v1400 = vadd.f32 0.0, %v1399
    %v1401 = vpop.f32.mrb[0].mxu0
    %v1402 = vadd.f32 0.0, %v1401
    %v1403 = vpop.f32.mrb[0].mxu0
    %v1404 = vadd.f32 0.0, %v1403
    %1405 = vmatprep.mubr.bf16.mxu0 0
    %1406 = vmatmul.mubr.bf16.gmra.mrb[0].mxu0 %v1328
    %v1407 = vpop.f32.mrb[0].mxu0
    %v1408 = vadd.f32 0.0, %v1407
    %v1409 = vpop.f32.mrb[0].mxu0
    %v1410 = vadd.f32 0.0, %v1409
    %v1411 = vpop.f32.mrb[0].mxu0
    %v1412 = vadd.f32 0.0, %v1411
    %v1413 = vpop.f32.mrb[0].mxu0
    %v1414 = vadd.f32 0.0, %v1413
    %1415 = vmatprep.mubr.bf16.mxu0 0
    %1416 = vmatmul.mubr.bf16.gmra.mrb[0].mxu0 %v1331
    %v1417 = vpop.f32.mrb[0].mxu0
    %v1418 = vadd.f32 0.0, %v1417
    %v1419 = vpop.f32.mrb[0].mxu0
    %v1420 = vadd.f32 0.0, %v1419
    %v1421 = vpop.f32.mrb[0].mxu0
    %v1422 = vadd.f32 0.0, %v1421
    %v1423 = vpop.f32.mrb[0].mxu0
    %v1424 = vadd.f32 0.0, %v1423
    %1425 = vdwg.mxu0
    %1434 = vrot.lane.b32.xlu0 %v1368, 1
    %v1435 = vpop.permute.xlu0 %1434
    %1436 = vrot.lane.b32.xlu0 %v1370, 1
    %v1437 = vpop.permute.xlu0 %1436
    %1438 = vrot.lane.b32.xlu0 %v1372, 1
    %v1439 = vpop.permute.xlu0 %1438
    %1440 = vrot.lane.b32.xlu0 %v1374, 1
    %v1441 = vpop.permute.xlu0 %1440
    %1442 = vrot.lane.b32.xlu0 %v1378, 1
    %v1443 = vpop.permute.xlu0 %1442
    %1444 = vrot.lane.b32.xlu0 %v1380, 1
    %v1445 = vpop.permute.xlu0 %1444
    %1446 = vrot.lane.b32.xlu0 %v1382, 1
    %v1447 = vpop.permute.xlu0 %1446
    %1448 = vrot.lane.b32.xlu0 %v1384, 1
    %v1449 = vpop.permute.xlu0 %1448
    %v1450 = vsel %vm210, %v1435, %v1437
    %v1451 = vsel %vm210, %v1439, %v1441
    %v1452 = vsel %vm210, %v1443, %v1445
    %v1453 = vsel %vm210, %v1447, %v1449
    %v1462 = vsel %vm210, 0.0, %v1435
    %v1463 = vsel %vm210, 0.0, %v1439
    %v1464 = vsel %vm210, 0.0, %v1443
    %v1465 = vsel %vm210, 0.0, %v1447
    %v1466 = vadd.f32 %v1462, %v1388
    %v1467 = vadd.f32 %v1450, %v1390
    %v1468 = vadd.f32 %v1463, %v1392
    %v1469 = vadd.f32 %v1451, %v1394
    %v1470 = vadd.f32 %v1464, %v1398
    %v1471 = vadd.f32 %v1452, %v1400
    %v1472 = vadd.f32 %v1465, %v1402
    %v1473 = vadd.f32 %v1453, %v1404
    %1482 = vrot.lane.b32.xlu0 %v1408, 127
    %v1483 = vpop.permute.xlu0 %1482
    %1484 = vrot.lane.b32.xlu0 %v1410, 127
    %v1485 = vpop.permute.xlu0 %1484
    %1486 = vrot.lane.b32.xlu0 %v1412, 127
    %v1487 = vpop.permute.xlu0 %1486
    %1488 = vrot.lane.b32.xlu0 %v1414, 127
    %v1489 = vpop.permute.xlu0 %1488
    %1490 = vrot.lane.b32.xlu0 %v1418, 127
    %v1491 = vpop.permute.xlu0 %1490
    %1492 = vrot.lane.b32.xlu0 %v1420, 127
    %v1493 = vpop.permute.xlu0 %1492
    %1494 = vrot.lane.b32.xlu0 %v1422, 127
    %v1495 = vpop.permute.xlu0 %1494
    %1496 = vrot.lane.b32.xlu0 %v1424, 127
    %v1497 = vpop.permute.xlu0 %1496
    %v1498 = vsel %vm259, %v1483, %v1485
    %v1499 = vsel %vm259, %v1487, %v1489
    %v1500 = vsel %vm259, %v1491, %v1493
    %v1501 = vsel %vm259, %v1495, %v1497
    %v1510 = vsel %vm259, %v1485, 0.0
    %v1511 = vsel %vm259, %v1489, 0.0
    %v1512 = vsel %vm259, %v1493, 0.0
    %v1513 = vsel %vm259, %v1497, 0.0
    %v1514 = vadd.f32 %v1466, %v1498
    %v1515 = vadd.f32 %v1467, %v1510
    %v1516 = vadd.f32 %v1468, %v1499
    %v1517 = vadd.f32 %v1469, %v1511
    %v1518 = vadd.f32 %v1470, %v1500
    %v1519 = vadd.f32 %v1471, %v1512
    %v1520 = vadd.f32 %v1472, %v1501
    %v1521 = vadd.f32 %v1473, %v1513
    %s1522 = scalar_lea.vmem %s2, 128
    %v1523 = vld [vmem:[%s1522] sm:$0xff]
    %v1524 = vld [vmem:[%s1522 + $0x8] sm:$0xff]
    %v1525 = vld [vmem:[%s1522 + $0x10] sm:$0xff]
    %v1526 = vld [vmem:[%s1522 + $0x18] sm:$0xff]
    %1528 = vset.pattern.permute.xlu0 0
    %1529 = vperm.xlu0 %1528, %v1523
    %v1530 = vpop.permute.xlu0 %1529
    %1533 = vset.pattern.permute.xlu0 0
    %1534 = vperm.xlu0 %1533, %v1524
    %v1535 = vpop.permute.xlu0 %1534
    %1538 = vset.pattern.permute.xlu0 0
    %1539 = vperm.xlu0 %1538, %v1525
    %v1540 = vpop.permute.xlu0 %1539
    %1543 = vset.pattern.permute.xlu0 0
    %1544 = vperm.xlu0 %1543, %v1526
    %v1545 = vpop.permute.xlu0 %1544
    %v1547 = vadd.f32 %v1514, %v1530
    %v1548 = vadd.f32 %v1515, %v1530
    %v1549 = vadd.f32 %v1516, %v1535
    %v1550 = vadd.f32 %v1517, %v1535
    %v1551 = vadd.f32 %v1518, %v1540
    %v1552 = vadd.f32 %v1519, %v1540
    %v1553 = vadd.f32 %v1520, %v1545
    %v1554 = vadd.f32 %v1521, %v1545
    %v1555 = vmul.f32 %v1547, %v320
    %v1556 = vmul.f32 %v1548, %v324
    %v1557 = vmul.f32 %v1549, %v320
    %v1558 = vmul.f32 %v1550, %v324
    %v1559 = vmul.f32 %v1551, %v320
    %v1560 = vmul.f32 %v1552, %v324
    %v1561 = vmul.f32 %v1553, %v320
    %v1562 = vmul.f32 %v1554, %v324
    %v1563 = vmul.f32 %v1555, 0.2
    %v1564 = vmul.f32 %v1556, 0.2
    %v1565 = vmul.f32 %v1557, 0.2
    %v1566 = vmul.f32 %v1558, 0.2
    %v1567 = vmul.f32 %v1559, 0.2
    %v1568 = vmul.f32 %v1560, 0.2
    %v1569 = vmul.f32 %v1561, 0.2
    %v1570 = vmul.f32 %v1562, 0.2
    %v1571 = vmax.f32 %v1555, %v1563
    %v1572 = vmax.f32 %v1556, %v1564
    %v1573 = vmax.f32 %v1557, %v1565
    %v1574 = vmax.f32 %v1558, %v1566
    %v1575 = vmax.f32 %v1559, %v1567
    %v1576 = vmax.f32 %v1560, %v1568
    %v1577 = vmax.f32 %v1561, %v1569
    %v1578 = vmax.f32 %v1562, %v1570
    %s1579 = scalar_lea.vmem %s1, 240
    %v1580 = vld [vmem:[%s1579] sm:$0xf]
    %v1581 = vld [vmem:[%s1579 + $0x4] sm:$0xf]
    %v1582 = vld [vmem:[%s1579 + $0x8] sm:$0xf]
    %v1583 = vld [vmem:[%s1579 + $0xc] sm:$0xf]
    %v1584 = vld [vmem:[%s1579 + $0x10] sm:$0xf]
    %v1585 = vld [vmem:[%s1579 + $0x14] sm:$0xf]
    %v1586 = vld [vmem:[%s1579 + $0x18] sm:$0xf]
    %v1587 = vld [vmem:[%s1579 + $0x1c] sm:$0xf]
    %v1588 = vld [vmem:[%s1579 + $0x20] sm:$0xf]
    %v1589 = vld [vmem:[%s1579 + $0x24] sm:$0xf]
    %v1590 = vld [vmem:[%s1579 + $0x28] sm:$0xf]
    %v1591 = vld [vmem:[%s1579 + $0x2c] sm:$0xf]
    %v1592 = vpack.c.bf16 %v1573, %v1571
    %v1593 = vpack.c.bf16 %v1574, %v1572
    %v1594 = vpack.c.bf16 %v1577, %v1575
    %v1595 = vpack.c.bf16 %v1578, %v1576
    %v1608 = vunpack.c.l.b16 %v1580
    %v1609 = vunpack.c.l.b16 %v1581
    %v1610 = vunpack.c.l.b16 %v1582
    %v1611 = vunpack.c.l.b16 %v1583
    %v1612 = vunpack.c.l.b16 %v1584
    %v1613 = vunpack.c.l.b16 %v1585
    %v1614 = vunpack.c.l.b16 %v1586
    %v1615 = vunpack.c.l.b16 %v1587
    %v1616 = vunpack.c.l.b16 %v1588
    %v1617 = vunpack.c.l.b16 %v1589
    %v1618 = vunpack.c.l.b16 %v1590
    %v1619 = vunpack.c.l.b16 %v1591
    %v1620 = vpack.c.b16 %v1609, %v1608
    %v1621 = vpack.c.b16 %v1611, %v1610
    %v1622 = vpack.c.b16 %v1613, %v1612
    %v1623 = vpack.c.b16 %v1615, %v1614
    %v1624 = vpack.c.b16 %v1617, %v1616
    %v1625 = vpack.c.b16 %v1619, %v1618
    %v1627 = vsel %vm74, %v1620, 0
    %v1630 = vsel %vm74, %v1621, 0
    %v1633 = vsel %vm74, %v1622, 0
    %v1636 = vsel %vm74, %v1623, 0
    %v1639 = vsel %vm74, %v1624, 0
    %v1642 = vsel %vm74, %v1625, 0
    %1644 = vmatprep.subr.bf16.mxu0 %v1593
    %1645 = vmatpush1.bf16.msra.mxu0 %v1592
    %1646 = vmatprep.subr.bf16.mxu0 %v1595
    %1647 = vmatpush1.bf16.msra.mxu0 %v1594
    %1648 = vmatprep.subr.bf16.mxu0 0
    %1649 = vmatpush1.bf16.msra.mxu0 0
    %1650 = vmatprep.subr.bf16.mxu0 0
    %1651 = vmatpush1.bf16.msra.mxu0 0
    %1652 = vmatprep.subr.bf16.mxu0 0
    %1653 = vmatpush1.bf16.msra.mxu0 0
    %1654 = vmatprep.subr.bf16.mxu0 0
    %1655 = vmatpush1.bf16.msra.mxu0 0
    %1656 = vmatprep.subr.bf16.mxu0 0
    %1657 = vmatpush1.bf16.msra.mxu0 0
    %1658 = vmatprep.subr.bf16.mxu0 0
    %1659 = vmatpush1.bf16.msra.mxu0 0
    %1660 = vmatprep.subr.bf16.mxu0 0
    %1661 = vmatpush1.bf16.msra.mxu0 0
    %1662 = vmatprep.subr.bf16.mxu0 0
    %1663 = vmatpush1.bf16.msra.mxu0 0
    %1664 = vmatprep.subr.bf16.mxu0 0
    %1665 = vmatpush1.bf16.msra.mxu0 0
    %1666 = vmatprep.subr.bf16.mxu0 0
    %1667 = vmatpush1.bf16.msra.mxu0 0
    %1668 = vmatprep.subr.bf16.mxu0 0
    %1669 = vmatpush1.bf16.msra.mxu0 0
    %1670 = vmatprep.subr.bf16.mxu0 0
    %1671 = vmatpush1.bf16.msra.mxu0 0
    %1672 = vmatprep.subr.bf16.mxu0 0
    %1673 = vmatpush1.bf16.msra.mxu0 0
    %1674 = vmatprep.subr.bf16.mxu0 0
    %1675 = vmatpush1.bf16.msra.mxu0 0
    %1676 = vmatprep.mubr.bf16.mxu0 0
    %1677 = vmatmul.mubr.bf16.gmra.mrb[0].mxu0 %v1627
    %v1678 = vpop.f32.mrb[0].mxu0
    %v1679 = vadd.f32 0.0, %v1678
    %v1680 = vpop.f32.mrb[0].mxu0
    %v1681 = vadd.f32 0.0, %v1680
    %v1682 = vpop.f32.mrb[0].mxu0
    %v1683 = vadd.f32 0.0, %v1682
    %v1684 = vpop.f32.mrb[0].mxu0
    %v1685 = vadd.f32 0.0, %v1684
    %1686 = vmatprep.mubr.bf16.mxu0 0
    %1687 = vmatmul.mubr.bf16.gmra.mrb[0].mxu0 %v1630
    %v1688 = vpop.f32.mrb[0].mxu0
    %v1689 = vadd.f32 0.0, %v1688
    %v1690 = vpop.f32.mrb[0].mxu0
    %v1691 = vadd.f32 0.0, %v1690
    %v1692 = vpop.f32.mrb[0].mxu0
    %v1693 = vadd.f32 0.0, %v1692
    %v1694 = vpop.f32.mrb[0].mxu0
    %v1695 = vadd.f32 0.0, %v1694
    %1696 = vmatprep.mubr.bf16.mxu0 0
    %1697 = vmatmul.mubr.bf16.gmra.mrb[0].mxu0 %v1633
    %v1698 = vpop.f32.mrb[0].mxu0
    %v1699 = vadd.f32 0.0, %v1698
    %v1700 = vpop.f32.mrb[0].mxu0
    %v1701 = vadd.f32 0.0, %v1700
    %v1702 = vpop.f32.mrb[0].mxu0
    %v1703 = vadd.f32 0.0, %v1702
    %v1704 = vpop.f32.mrb[0].mxu0
    %v1705 = vadd.f32 0.0, %v1704
    %1706 = vmatprep.mubr.bf16.mxu0 0
    %1707 = vmatmul.mubr.bf16.gmra.mrb[0].mxu0 %v1636
    %v1708 = vpop.f32.mrb[0].mxu0
    %v1709 = vadd.f32 0.0, %v1708
    %v1710 = vpop.f32.mrb[0].mxu0
    %v1711 = vadd.f32 0.0, %v1710
    %v1712 = vpop.f32.mrb[0].mxu0
    %v1713 = vadd.f32 0.0, %v1712
    %v1714 = vpop.f32.mrb[0].mxu0
    %v1715 = vadd.f32 0.0, %v1714
    %1716 = vmatprep.mubr.bf16.mxu0 0
    %1717 = vmatmul.mubr.bf16.gmra.mrb[0].mxu0 %v1639
    %v1718 = vpop.f32.mrb[0].mxu0
    %v1719 = vadd.f32 0.0, %v1718
    %v1720 = vpop.f32.mrb[0].mxu0
    %v1721 = vadd.f32 0.0, %v1720
    %v1722 = vpop.f32.mrb[0].mxu0
    %v1723 = vadd.f32 0.0, %v1722
    %v1724 = vpop.f32.mrb[0].mxu0
    %v1725 = vadd.f32 0.0, %v1724
    %1726 = vmatprep.mubr.bf16.mxu0 0
    %1727 = vmatmul.mubr.bf16.gmra.mrb[0].mxu0 %v1642
    %v1728 = vpop.f32.mrb[0].mxu0
    %v1729 = vadd.f32 0.0, %v1728
    %v1730 = vpop.f32.mrb[0].mxu0
    %v1731 = vadd.f32 0.0, %v1730
    %v1732 = vpop.f32.mrb[0].mxu0
    %v1733 = vadd.f32 0.0, %v1732
    %v1734 = vpop.f32.mrb[0].mxu0
    %v1735 = vadd.f32 0.0, %v1734
    %1736 = vdwg.mxu0
    %1745 = vrot.lane.b32.xlu0 %v1679, 1
    %v1746 = vpop.permute.xlu0 %1745
    %1747 = vrot.lane.b32.xlu0 %v1681, 1
    %v1748 = vpop.permute.xlu0 %1747
    %1749 = vrot.lane.b32.xlu0 %v1683, 1
    %v1750 = vpop.permute.xlu0 %1749
    %1751 = vrot.lane.b32.xlu0 %v1685, 1
    %v1752 = vpop.permute.xlu0 %1751
    %1753 = vrot.lane.b32.xlu0 %v1689, 1
    %v1754 = vpop.permute.xlu0 %1753
    %1755 = vrot.lane.b32.xlu0 %v1691, 1
    %v1756 = vpop.permute.xlu0 %1755
    %1757 = vrot.lane.b32.xlu0 %v1693, 1
    %v1758 = vpop.permute.xlu0 %1757
    %1759 = vrot.lane.b32.xlu0 %v1695, 1
    %v1760 = vpop.permute.xlu0 %1759
    %v1761 = vsel %vm210, %v1746, %v1748
    %v1762 = vsel %vm210, %v1750, %v1752
    %v1763 = vsel %vm210, %v1754, %v1756
    %v1764 = vsel %vm210, %v1758, %v1760
    %v1773 = vsel %vm210, 0.0, %v1746
    %v1774 = vsel %vm210, 0.0, %v1750
    %v1775 = vsel %vm210, 0.0, %v1754
    %v1776 = vsel %vm210, 0.0, %v1758
    %v1777 = vadd.f32 %v1773, %v1699
    %v1778 = vadd.f32 %v1761, %v1701
    %v1779 = vadd.f32 %v1774, %v1703
    %v1780 = vadd.f32 %v1762, %v1705
    %v1781 = vadd.f32 %v1775, %v1709
    %v1782 = vadd.f32 %v1763, %v1711
    %v1783 = vadd.f32 %v1776, %v1713
    %v1784 = vadd.f32 %v1764, %v1715
    %1793 = vrot.lane.b32.xlu0 %v1719, 127
    %v1794 = vpop.permute.xlu0 %1793
    %1795 = vrot.lane.b32.xlu0 %v1721, 127
    %v1796 = vpop.permute.xlu0 %1795
    %1797 = vrot.lane.b32.xlu0 %v1723, 127
    %v1798 = vpop.permute.xlu0 %1797
    %1799 = vrot.lane.b32.xlu0 %v1725, 127
    %v1800 = vpop.permute.xlu0 %1799
    %1801 = vrot.lane.b32.xlu0 %v1729, 127
    %v1802 = vpop.permute.xlu0 %1801
    %1803 = vrot.lane.b32.xlu0 %v1731, 127
    %v1804 = vpop.permute.xlu0 %1803
    %1805 = vrot.lane.b32.xlu0 %v1733, 127
    %v1806 = vpop.permute.xlu0 %1805
    %1807 = vrot.lane.b32.xlu0 %v1735, 127
    %v1808 = vpop.permute.xlu0 %1807
    %v1809 = vsel %vm259, %v1794, %v1796
    %v1810 = vsel %vm259, %v1798, %v1800
    %v1811 = vsel %vm259, %v1802, %v1804
    %v1812 = vsel %vm259, %v1806, %v1808
    %v1821 = vsel %vm259, %v1796, 0.0
    %v1822 = vsel %vm259, %v1800, 0.0
    %v1823 = vsel %vm259, %v1804, 0.0
    %v1824 = vsel %vm259, %v1808, 0.0
    %v1825 = vadd.f32 %v1777, %v1809
    %v1826 = vadd.f32 %v1778, %v1821
    %v1827 = vadd.f32 %v1779, %v1810
    %v1828 = vadd.f32 %v1780, %v1822
    %v1829 = vadd.f32 %v1781, %v1811
    %v1830 = vadd.f32 %v1782, %v1823
    %v1831 = vadd.f32 %v1783, %v1812
    %v1832 = vadd.f32 %v1784, %v1824
    %s1833 = scalar_lea.vmem %s2, 160
    %v1834 = vld [vmem:[%s1833] sm:$0xff]
    %v1835 = vld [vmem:[%s1833 + $0x8] sm:$0xff]
    %v1836 = vld [vmem:[%s1833 + $0x10] sm:$0xff]
    %v1837 = vld [vmem:[%s1833 + $0x18] sm:$0xff]
    %1839 = vset.pattern.permute.xlu0 0
    %1840 = vperm.xlu0 %1839, %v1834
    %v1841 = vpop.permute.xlu0 %1840
    %1844 = vset.pattern.permute.xlu0 0
    %1845 = vperm.xlu0 %1844, %v1835
    %v1846 = vpop.permute.xlu0 %1845
    %1849 = vset.pattern.permute.xlu0 0
    %1850 = vperm.xlu0 %1849, %v1836
    %v1851 = vpop.permute.xlu0 %1850
    %1854 = vset.pattern.permute.xlu0 0
    %1855 = vperm.xlu0 %1854, %v1837
    %v1856 = vpop.permute.xlu0 %1855
    %v1858 = vadd.f32 %v1825, %v1841
    %v1859 = vadd.f32 %v1826, %v1841
    %v1860 = vadd.f32 %v1827, %v1846
    %v1861 = vadd.f32 %v1828, %v1846
    %v1862 = vadd.f32 %v1829, %v1851
    %v1863 = vadd.f32 %v1830, %v1851
    %v1864 = vadd.f32 %v1831, %v1856
    %v1865 = vadd.f32 %v1832, %v1856
    %v1866 = vmul.f32 %v1858, %v320
    %v1867 = vmul.f32 %v1859, %v324
    %v1868 = vmul.f32 %v1860, %v320
    %v1869 = vmul.f32 %v1861, %v324
    %v1870 = vmul.f32 %v1862, %v320
    %v1871 = vmul.f32 %v1863, %v324
    %v1872 = vmul.f32 %v1864, %v320
    %v1873 = vmul.f32 %v1865, %v324
    %v1874 = vadd.f32 %v1866, %v949
    %v1875 = vadd.f32 %v1867, %v950
    %v1876 = vadd.f32 %v1868, %v951
    %v1877 = vadd.f32 %v1869, %v952
    %v1878 = vadd.f32 %v1870, %v953
    %v1879 = vadd.f32 %v1871, %v954
    %v1880 = vadd.f32 %v1872, %v955
    %v1881 = vadd.f32 %v1873, %v956
    %s1882 = scalar_lea.vmem %s1, 288
    %v1883 = vld [vmem:[%s1882] sm:$0xf]
    %v1884 = vld [vmem:[%s1882 + $0x4] sm:$0xf]
    %v1885 = vld [vmem:[%s1882 + $0x8] sm:$0xf]
    %v1886 = vld [vmem:[%s1882 + $0xc] sm:$0xf]
    %v1887 = vld [vmem:[%s1882 + $0x10] sm:$0xf]
    %v1888 = vld [vmem:[%s1882 + $0x14] sm:$0xf]
    %v1889 = vld [vmem:[%s1882 + $0x18] sm:$0xf]
    %v1890 = vld [vmem:[%s1882 + $0x1c] sm:$0xf]
    %v1891 = vld [vmem:[%s1882 + $0x20] sm:$0xf]
    %v1892 = vld [vmem:[%s1882 + $0x24] sm:$0xf]
    %v1893 = vld [vmem:[%s1882 + $0x28] sm:$0xf]
    %v1894 = vld [vmem:[%s1882 + $0x2c] sm:$0xf]
    %v1895 = vpack.c.bf16 %v1876, %v1874
    %v1896 = vpack.c.bf16 %v1877, %v1875
    %v1897 = vpack.c.bf16 %v1880, %v1878
    %v1898 = vpack.c.bf16 %v1881, %v1879
    %v1911 = vunpack.c.l.b16 %v1883
    %v1912 = vunpack.c.l.b16 %v1884
    %v1913 = vunpack.c.l.b16 %v1885
    %v1914 = vunpack.c.l.b16 %v1886
    %v1915 = vunpack.c.l.b16 %v1887
    %v1916 = vunpack.c.l.b16 %v1888
    %v1917 = vunpack.c.l.b16 %v1889
    %v1918 = vunpack.c.l.b16 %v1890
    %v1919 = vunpack.c.l.b16 %v1891
    %v1920 = vunpack.c.l.b16 %v1892
    %v1921 = vunpack.c.l.b16 %v1893
    %v1922 = vunpack.c.l.b16 %v1894
    %v1923 = vpack.c.b16 %v1912, %v1911
    %v1924 = vpack.c.b16 %v1914, %v1913
    %v1925 = vpack.c.b16 %v1916, %v1915
    %v1926 = vpack.c.b16 %v1918, %v1917
    %v1927 = vpack.c.b16 %v1920, %v1919
    %v1928 = vpack.c.b16 %v1922, %v1921
    %v1930 = vsel %vm74, %v1923, 0
    %v1933 = vsel %vm74, %v1924, 0
    %v1936 = vsel %vm74, %v1925, 0
    %v1939 = vsel %vm74, %v1926, 0
    %v1942 = vsel %vm74, %v1927, 0
    %v1945 = vsel %vm74, %v1928, 0
    %1947 = vmatprep.subr.bf16.mxu0 %v1896
    %1948 = vmatpush1.bf16.msra.mxu0 %v1895
    %1949 = vmatprep.subr.bf16.mxu0 %v1898
    %1950 = vmatpush1.bf16.msra.mxu0 %v1897
    %1951 = vmatprep.subr.bf16.mxu0 0
    %1952 = vmatpush1.bf16.msra.mxu0 0
    %1953 = vmatprep.subr.bf16.mxu0 0
    %1954 = vmatpush1.bf16.msra.mxu0 0
    %1955 = vmatprep.subr.bf16.mxu0 0
    %1956 = vmatpush1.bf16.msra.mxu0 0
    %1957 = vmatprep.subr.bf16.mxu0 0
    %1958 = vmatpush1.bf16.msra.mxu0 0
    %1959 = vmatprep.subr.bf16.mxu0 0
    %1960 = vmatpush1.bf16.msra.mxu0 0
    %1961 = vmatprep.subr.bf16.mxu0 0
    %1962 = vmatpush1.bf16.msra.mxu0 0
    %1963 = vmatprep.subr.bf16.mxu0 0
    %1964 = vmatpush1.bf16.msra.mxu0 0
    %1965 = vmatprep.subr.bf16.mxu0 0
    %1966 = vmatpush1.bf16.msra.mxu0 0
    %1967 = vmatprep.subr.bf16.mxu0 0
    %1968 = vmatpush1.bf16.msra.mxu0 0
    %1969 = vmatprep.subr.bf16.mxu0 0
    %1970 = vmatpush1.bf16.msra.mxu0 0
    %1971 = vmatprep.subr.bf16.mxu0 0
    %1972 = vmatpush1.bf16.msra.mxu0 0
    %1973 = vmatprep.subr.bf16.mxu0 0
    %1974 = vmatpush1.bf16.msra.mxu0 0
    %1975 = vmatprep.subr.bf16.mxu0 0
    %1976 = vmatpush1.bf16.msra.mxu0 0
    %1977 = vmatprep.subr.bf16.mxu0 0
    %1978 = vmatpush1.bf16.msra.mxu0 0
    %1979 = vmatprep.mubr.bf16.mxu0 0
    %1980 = vmatmul.mubr.bf16.gmra.mrb[0].mxu0 %v1930
    %v1981 = vpop.f32.mrb[0].mxu0
    %v1982 = vadd.f32 0.0, %v1981
    %v1983 = vpop.f32.mrb[0].mxu0
    %v1984 = vadd.f32 0.0, %v1983
    %v1985 = vpop.f32.mrb[0].mxu0
    %v1986 = vadd.f32 0.0, %v1985
    %v1987 = vpop.f32.mrb[0].mxu0
    %v1988 = vadd.f32 0.0, %v1987
    %1989 = vmatprep.mubr.bf16.mxu0 0
    %1990 = vmatmul.mubr.bf16.gmra.mrb[0].mxu0 %v1933
    %v1991 = vpop.f32.mrb[0].mxu0
    %v1992 = vadd.f32 0.0, %v1991
    %v1993 = vpop.f32.mrb[0].mxu0
    %v1994 = vadd.f32 0.0, %v1993
    %v1995 = vpop.f32.mrb[0].mxu0
    %v1996 = vadd.f32 0.0, %v1995
    %v1997 = vpop.f32.mrb[0].mxu0
    %v1998 = vadd.f32 0.0, %v1997
    %1999 = vmatprep.mubr.bf16.mxu0 0
    %2000 = vmatmul.mubr.bf16.gmra.mrb[0].mxu0 %v1936
    %v2001 = vpop.f32.mrb[0].mxu0
    %v2002 = vadd.f32 0.0, %v2001
    %v2003 = vpop.f32.mrb[0].mxu0
    %v2004 = vadd.f32 0.0, %v2003
    %v2005 = vpop.f32.mrb[0].mxu0
    %v2006 = vadd.f32 0.0, %v2005
    %v2007 = vpop.f32.mrb[0].mxu0
    %v2008 = vadd.f32 0.0, %v2007
    %2009 = vmatprep.mubr.bf16.mxu0 0
    %2010 = vmatmul.mubr.bf16.gmra.mrb[0].mxu0 %v1939
    %v2011 = vpop.f32.mrb[0].mxu0
    %v2012 = vadd.f32 0.0, %v2011
    %v2013 = vpop.f32.mrb[0].mxu0
    %v2014 = vadd.f32 0.0, %v2013
    %v2015 = vpop.f32.mrb[0].mxu0
    %v2016 = vadd.f32 0.0, %v2015
    %v2017 = vpop.f32.mrb[0].mxu0
    %v2018 = vadd.f32 0.0, %v2017
    %2019 = vmatprep.mubr.bf16.mxu0 0
    %2020 = vmatmul.mubr.bf16.gmra.mrb[0].mxu0 %v1942
    %v2021 = vpop.f32.mrb[0].mxu0
    %v2022 = vadd.f32 0.0, %v2021
    %v2023 = vpop.f32.mrb[0].mxu0
    %v2024 = vadd.f32 0.0, %v2023
    %v2025 = vpop.f32.mrb[0].mxu0
    %v2026 = vadd.f32 0.0, %v2025
    %v2027 = vpop.f32.mrb[0].mxu0
    %v2028 = vadd.f32 0.0, %v2027
    %2029 = vmatprep.mubr.bf16.mxu0 0
    %2030 = vmatmul.mubr.bf16.gmra.mrb[0].mxu0 %v1945
    %v2031 = vpop.f32.mrb[0].mxu0
    %v2032 = vadd.f32 0.0, %v2031
    %v2033 = vpop.f32.mrb[0].mxu0
    %v2034 = vadd.f32 0.0, %v2033
    %v2035 = vpop.f32.mrb[0].mxu0
    %v2036 = vadd.f32 0.0, %v2035
    %v2037 = vpop.f32.mrb[0].mxu0
    %v2038 = vadd.f32 0.0, %v2037
    %2039 = vdwg.mxu0
    %2048 = vrot.lane.b32.xlu0 %v1982, 1
    %v2049 = vpop.permute.xlu0 %2048
    %2050 = vrot.lane.b32.xlu0 %v1984, 1
    %v2051 = vpop.permute.xlu0 %2050
    %2052 = vrot.lane.b32.xlu0 %v1986, 1
    %v2053 = vpop.permute.xlu0 %2052
    %2054 = vrot.lane.b32.xlu0 %v1988, 1
    %v2055 = vpop.permute.xlu0 %2054
    %2056 = vrot.lane.b32.xlu0 %v1992, 1
    %v2057 = vpop.permute.xlu0 %2056
    %2058 = vrot.lane.b32.xlu0 %v1994, 1
    %v2059 = vpop.permute.xlu0 %2058
    %2060 = vrot.lane.b32.xlu0 %v1996, 1
    %v2061 = vpop.permute.xlu0 %2060
    %2062 = vrot.lane.b32.xlu0 %v1998, 1
    %v2063 = vpop.permute.xlu0 %2062
    %v2064 = vsel %vm210, %v2049, %v2051
    %v2065 = vsel %vm210, %v2053, %v2055
    %v2066 = vsel %vm210, %v2057, %v2059
    %v2067 = vsel %vm210, %v2061, %v2063
    %v2076 = vsel %vm210, 0.0, %v2049
    %v2077 = vsel %vm210, 0.0, %v2053
    %v2078 = vsel %vm210, 0.0, %v2057
    %v2079 = vsel %vm210, 0.0, %v2061
    %v2080 = vadd.f32 %v2076, %v2002
    %v2081 = vadd.f32 %v2064, %v2004
    %v2082 = vadd.f32 %v2077, %v2006
    %v2083 = vadd.f32 %v2065, %v2008
    %v2084 = vadd.f32 %v2078, %v2012
    %v2085 = vadd.f32 %v2066, %v2014
    %v2086 = vadd.f32 %v2079, %v2016
    %v2087 = vadd.f32 %v2067, %v2018
    %2096 = vrot.lane.b32.xlu0 %v2022, 127
    %v2097 = vpop.permute.xlu0 %2096
    %2098 = vrot.lane.b32.xlu0 %v2024, 127
    %v2099 = vpop.permute.xlu0 %2098
    %2100 = vrot.lane.b32.xlu0 %v2026, 127
    %v2101 = vpop.permute.xlu0 %2100
    %2102 = vrot.lane.b32.xlu0 %v2028, 127
    %v2103 = vpop.permute.xlu0 %2102
    %2104 = vrot.lane.b32.xlu0 %v2032, 127
    %v2105 = vpop.permute.xlu0 %2104
    %2106 = vrot.lane.b32.xlu0 %v2034, 127
    %v2107 = vpop.permute.xlu0 %2106
    %2108 = vrot.lane.b32.xlu0 %v2036, 127
    %v2109 = vpop.permute.xlu0 %2108
    %2110 = vrot.lane.b32.xlu0 %v2038, 127
    %v2111 = vpop.permute.xlu0 %2110
    %v2112 = vsel %vm259, %v2097, %v2099
    %v2113 = vsel %vm259, %v2101, %v2103
    %v2114 = vsel %vm259, %v2105, %v2107
    %v2115 = vsel %vm259, %v2109, %v2111
    %v2124 = vsel %vm259, %v2099, 0.0
    %v2125 = vsel %vm259, %v2103, 0.0
    %v2126 = vsel %vm259, %v2107, 0.0
    %v2127 = vsel %vm259, %v2111, 0.0
    %v2128 = vadd.f32 %v2080, %v2112
    %v2129 = vadd.f32 %v2081, %v2124
    %v2130 = vadd.f32 %v2082, %v2113
    %v2131 = vadd.f32 %v2083, %v2125
    %v2132 = vadd.f32 %v2084, %v2114
    %v2133 = vadd.f32 %v2085, %v2126
    %v2134 = vadd.f32 %v2086, %v2115
    %v2135 = vadd.f32 %v2087, %v2127
    %s2136 = scalar_lea.vmem %s2, 192
    %v2137 = vld [vmem:[%s2136] sm:$0xff]
    %v2138 = vld [vmem:[%s2136 + $0x8] sm:$0xff]
    %v2139 = vld [vmem:[%s2136 + $0x10] sm:$0xff]
    %v2140 = vld [vmem:[%s2136 + $0x18] sm:$0xff]
    %2142 = vset.pattern.permute.xlu0 0
    %2143 = vperm.xlu0 %2142, %v2137
    %v2144 = vpop.permute.xlu0 %2143
    %2147 = vset.pattern.permute.xlu0 0
    %2148 = vperm.xlu0 %2147, %v2138
    %v2149 = vpop.permute.xlu0 %2148
    %2152 = vset.pattern.permute.xlu0 0
    %2153 = vperm.xlu0 %2152, %v2139
    %v2154 = vpop.permute.xlu0 %2153
    %2157 = vset.pattern.permute.xlu0 0
    %2158 = vperm.xlu0 %2157, %v2140
    %v2159 = vpop.permute.xlu0 %2158
    %v2161 = vadd.f32 %v2128, %v2144
    %v2162 = vadd.f32 %v2129, %v2144
    %v2163 = vadd.f32 %v2130, %v2149
    %v2164 = vadd.f32 %v2131, %v2149
    %v2165 = vadd.f32 %v2132, %v2154
    %v2166 = vadd.f32 %v2133, %v2154
    %v2167 = vadd.f32 %v2134, %v2159
    %v2168 = vadd.f32 %v2135, %v2159
    %v2169 = vmul.f32 %v2161, %v320
    %v2170 = vmul.f32 %v2162, %v324
    %v2171 = vmul.f32 %v2163, %v320
    %v2172 = vmul.f32 %v2164, %v324
    %v2173 = vmul.f32 %v2165, %v320
    %v2174 = vmul.f32 %v2166, %v324
    %v2175 = vmul.f32 %v2167, %v320
    %v2176 = vmul.f32 %v2168, %v324
    %v2177 = vmul.f32 %v2169, 0.2
    %v2178 = vmul.f32 %v2170, 0.2
    %v2179 = vmul.f32 %v2171, 0.2
    %v2180 = vmul.f32 %v2172, 0.2
    %v2181 = vmul.f32 %v2173, 0.2
    %v2182 = vmul.f32 %v2174, 0.2
    %v2183 = vmul.f32 %v2175, 0.2
    %v2184 = vmul.f32 %v2176, 0.2
    %v2185 = vmax.f32 %v2169, %v2177
    %v2186 = vmax.f32 %v2170, %v2178
    %v2187 = vmax.f32 %v2171, %v2179
    %v2188 = vmax.f32 %v2172, %v2180
    %v2189 = vmax.f32 %v2173, %v2181
    %v2190 = vmax.f32 %v2174, %v2182
    %v2191 = vmax.f32 %v2175, %v2183
    %v2192 = vmax.f32 %v2176, %v2184
    %s2193 = scalar_lea.vmem %s1, 336
    %v2194 = vld [vmem:[%s2193] sm:$0xf]
    %v2195 = vld [vmem:[%s2193 + $0x4] sm:$0xf]
    %v2196 = vld [vmem:[%s2193 + $0x8] sm:$0xf]
    %v2197 = vld [vmem:[%s2193 + $0xc] sm:$0xf]
    %v2198 = vld [vmem:[%s2193 + $0x10] sm:$0xf]
    %v2199 = vld [vmem:[%s2193 + $0x14] sm:$0xf]
    %v2200 = vld [vmem:[%s2193 + $0x18] sm:$0xf]
    %v2201 = vld [vmem:[%s2193 + $0x1c] sm:$0xf]
    %v2202 = vld [vmem:[%s2193 + $0x20] sm:$0xf]
    %v2203 = vld [vmem:[%s2193 + $0x24] sm:$0xf]
    %v2204 = vld [vmem:[%s2193 + $0x28] sm:$0xf]
    %v2205 = vld [vmem:[%s2193 + $0x2c] sm:$0xf]
    %v2206 = vpack.c.bf16 %v2187, %v2185
    %v2207 = vpack.c.bf16 %v2188, %v2186
    %v2208 = vpack.c.bf16 %v2191, %v2189
    %v2209 = vpack.c.bf16 %v2192, %v2190
    %v2222 = vunpack.c.l.b16 %v2194
    %v2223 = vunpack.c.l.b16 %v2195
    %v2224 = vunpack.c.l.b16 %v2196
    %v2225 = vunpack.c.l.b16 %v2197
    %v2226 = vunpack.c.l.b16 %v2198
    %v2227 = vunpack.c.l.b16 %v2199
    %v2228 = vunpack.c.l.b16 %v2200
    %v2229 = vunpack.c.l.b16 %v2201
    %v2230 = vunpack.c.l.b16 %v2202
    %v2231 = vunpack.c.l.b16 %v2203
    %v2232 = vunpack.c.l.b16 %v2204
    %v2233 = vunpack.c.l.b16 %v2205
    %v2234 = vpack.c.b16 %v2223, %v2222
    %v2235 = vpack.c.b16 %v2225, %v2224
    %v2236 = vpack.c.b16 %v2227, %v2226
    %v2237 = vpack.c.b16 %v2229, %v2228
    %v2238 = vpack.c.b16 %v2231, %v2230
    %v2239 = vpack.c.b16 %v2233, %v2232
    %v2241 = vsel %vm74, %v2234, 0
    %v2244 = vsel %vm74, %v2235, 0
    %v2247 = vsel %vm74, %v2236, 0
    %v2250 = vsel %vm74, %v2237, 0
    %v2253 = vsel %vm74, %v2238, 0
    %v2256 = vsel %vm74, %v2239, 0
    %2258 = vmatprep.subr.bf16.mxu0 %v2207
    %2259 = vmatpush1.bf16.msra.mxu0 %v2206
    %2260 = vmatprep.subr.bf16.mxu0 %v2209
    %2261 = vmatpush1.bf16.msra.mxu0 %v2208
    %2262 = vmatprep.subr.bf16.mxu0 0
    %2263 = vmatpush1.bf16.msra.mxu0 0
    %2264 = vmatprep.subr.bf16.mxu0 0
    %2265 = vmatpush1.bf16.msra.mxu0 0
    %2266 = vmatprep.subr.bf16.mxu0 0
    %2267 = vmatpush1.bf16.msra.mxu0 0
    %2268 = vmatprep.subr.bf16.mxu0 0
    %2269 = vmatpush1.bf16.msra.mxu0 0
    %2270 = vmatprep.subr.bf16.mxu0 0
    %2271 = vmatpush1.bf16.msra.mxu0 0
    %2272 = vmatprep.subr.bf16.mxu0 0
    %2273 = vmatpush1.bf16.msra.mxu0 0
    %2274 = vmatprep.subr.bf16.mxu0 0
    %2275 = vmatpush1.bf16.msra.mxu0 0
    %2276 = vmatprep.subr.bf16.mxu0 0
    %2277 = vmatpush1.bf16.msra.mxu0 0
    %2278 = vmatprep.subr.bf16.mxu0 0
    %2279 = vmatpush1.bf16.msra.mxu0 0
    %2280 = vmatprep.subr.bf16.mxu0 0
    %2281 = vmatpush1.bf16.msra.mxu0 0
    %2282 = vmatprep.subr.bf16.mxu0 0
    %2283 = vmatpush1.bf16.msra.mxu0 0
    %2284 = vmatprep.subr.bf16.mxu0 0
    %2285 = vmatpush1.bf16.msra.mxu0 0
    %2286 = vmatprep.subr.bf16.mxu0 0
    %2287 = vmatpush1.bf16.msra.mxu0 0
    %2288 = vmatprep.subr.bf16.mxu0 0
    %2289 = vmatpush1.bf16.msra.mxu0 0
    %2290 = vmatprep.mubr.bf16.mxu0 0
    %2291 = vmatmul.mubr.bf16.gmra.mrb[0].mxu0 %v2241
    %v2292 = vpop.f32.mrb[0].mxu0
    %v2293 = vadd.f32 0.0, %v2292
    %v2294 = vpop.f32.mrb[0].mxu0
    %v2295 = vadd.f32 0.0, %v2294
    %v2296 = vpop.f32.mrb[0].mxu0
    %v2297 = vadd.f32 0.0, %v2296
    %v2298 = vpop.f32.mrb[0].mxu0
    %v2299 = vadd.f32 0.0, %v2298
    %2300 = vmatprep.mubr.bf16.mxu0 0
    %2301 = vmatmul.mubr.bf16.gmra.mrb[0].mxu0 %v2244
    %v2302 = vpop.f32.mrb[0].mxu0
    %v2303 = vadd.f32 0.0, %v2302
    %v2304 = vpop.f32.mrb[0].mxu0
    %v2305 = vadd.f32 0.0, %v2304
    %v2306 = vpop.f32.mrb[0].mxu0
    %v2307 = vadd.f32 0.0, %v2306
    %v2308 = vpop.f32.mrb[0].mxu0
    %v2309 = vadd.f32 0.0, %v2308
    %2310 = vmatprep.mubr.bf16.mxu0 0
    %2311 = vmatmul.mubr.bf16.gmra.mrb[0].mxu0 %v2247
    %v2312 = vpop.f32.mrb[0].mxu0
    %v2313 = vadd.f32 0.0, %v2312
    %v2314 = vpop.f32.mrb[0].mxu0
    %v2315 = vadd.f32 0.0, %v2314
    %v2316 = vpop.f32.mrb[0].mxu0
    %v2317 = vadd.f32 0.0, %v2316
    %v2318 = vpop.f32.mrb[0].mxu0
    %v2319 = vadd.f32 0.0, %v2318
    %2320 = vmatprep.mubr.bf16.mxu0 0
    %2321 = vmatmul.mubr.bf16.gmra.mrb[0].mxu0 %v2250
    %v2322 = vpop.f32.mrb[0].mxu0
    %v2323 = vadd.f32 0.0, %v2322
    %v2324 = vpop.f32.mrb[0].mxu0
    %v2325 = vadd.f32 0.0, %v2324
    %v2326 = vpop.f32.mrb[0].mxu0
    %v2327 = vadd.f32 0.0, %v2326
    %v2328 = vpop.f32.mrb[0].mxu0
    %v2329 = vadd.f32 0.0, %v2328
    %2330 = vmatprep.mubr.bf16.mxu0 0
    %2331 = vmatmul.mubr.bf16.gmra.mrb[0].mxu0 %v2253
    %v2332 = vpop.f32.mrb[0].mxu0
    %v2333 = vadd.f32 0.0, %v2332
    %v2334 = vpop.f32.mrb[0].mxu0
    %v2335 = vadd.f32 0.0, %v2334
    %v2336 = vpop.f32.mrb[0].mxu0
    %v2337 = vadd.f32 0.0, %v2336
    %v2338 = vpop.f32.mrb[0].mxu0
    %v2339 = vadd.f32 0.0, %v2338
    %2340 = vmatprep.mubr.bf16.mxu0 0
    %2341 = vmatmul.mubr.bf16.gmra.mrb[0].mxu0 %v2256
    %v2342 = vpop.f32.mrb[0].mxu0
    %v2343 = vadd.f32 0.0, %v2342
    %v2344 = vpop.f32.mrb[0].mxu0
    %v2345 = vadd.f32 0.0, %v2344
    %v2346 = vpop.f32.mrb[0].mxu0
    %v2347 = vadd.f32 0.0, %v2346
    %v2348 = vpop.f32.mrb[0].mxu0
    %v2349 = vadd.f32 0.0, %v2348
    %2350 = vdwg.mxu0
    %2359 = vrot.lane.b32.xlu0 %v2293, 1
    %v2360 = vpop.permute.xlu0 %2359
    %2361 = vrot.lane.b32.xlu0 %v2295, 1
    %v2362 = vpop.permute.xlu0 %2361
    %2363 = vrot.lane.b32.xlu0 %v2297, 1
    %v2364 = vpop.permute.xlu0 %2363
    %2365 = vrot.lane.b32.xlu0 %v2299, 1
    %v2366 = vpop.permute.xlu0 %2365
    %2367 = vrot.lane.b32.xlu0 %v2303, 1
    %v2368 = vpop.permute.xlu0 %2367
    %2369 = vrot.lane.b32.xlu0 %v2305, 1
    %v2370 = vpop.permute.xlu0 %2369
    %2371 = vrot.lane.b32.xlu0 %v2307, 1
    %v2372 = vpop.permute.xlu0 %2371
    %2373 = vrot.lane.b32.xlu0 %v2309, 1
    %v2374 = vpop.permute.xlu0 %2373
    %v2375 = vsel %vm210, %v2360, %v2362
    %v2376 = vsel %vm210, %v2364, %v2366
    %v2377 = vsel %vm210, %v2368, %v2370
    %v2378 = vsel %vm210, %v2372, %v2374
    %v2387 = vsel %vm210, 0.0, %v2360
    %v2388 = vsel %vm210, 0.0, %v2364
    %v2389 = vsel %vm210, 0.0, %v2368
    %v2390 = vsel %vm210, 0.0, %v2372
    %v2391 = vadd.f32 %v2387, %v2313
    %v2392 = vadd.f32 %v2375, %v2315
    %v2393 = vadd.f32 %v2388, %v2317
    %v2394 = vadd.f32 %v2376, %v2319
    %v2395 = vadd.f32 %v2389, %v2323
    %v2396 = vadd.f32 %v2377, %v2325
    %v2397 = vadd.f32 %v2390, %v2327
    %v2398 = vadd.f32 %v2378, %v2329
    %2407 = vrot.lane.b32.xlu0 %v2333, 127
    %v2408 = vpop.permute.xlu0 %2407
    %2409 = vrot.lane.b32.xlu0 %v2335, 127
    %v2410 = vpop.permute.xlu0 %2409
    %2411 = vrot.lane.b32.xlu0 %v2337, 127
    %v2412 = vpop.permute.xlu0 %2411
    %2413 = vrot.lane.b32.xlu0 %v2339, 127
    %v2414 = vpop.permute.xlu0 %2413
    %2415 = vrot.lane.b32.xlu0 %v2343, 127
    %v2416 = vpop.permute.xlu0 %2415
    %2417 = vrot.lane.b32.xlu0 %v2345, 127
    %v2418 = vpop.permute.xlu0 %2417
    %2419 = vrot.lane.b32.xlu0 %v2347, 127
    %v2420 = vpop.permute.xlu0 %2419
    %2421 = vrot.lane.b32.xlu0 %v2349, 127
    %v2422 = vpop.permute.xlu0 %2421
    %v2423 = vsel %vm259, %v2408, %v2410
    %v2424 = vsel %vm259, %v2412, %v2414
    %v2425 = vsel %vm259, %v2416, %v2418
    %v2426 = vsel %vm259, %v2420, %v2422
    %v2435 = vsel %vm259, %v2410, 0.0
    %v2436 = vsel %vm259, %v2414, 0.0
    %v2437 = vsel %vm259, %v2418, 0.0
    %v2438 = vsel %vm259, %v2422, 0.0
    %v2439 = vadd.f32 %v2391, %v2423
    %v2440 = vadd.f32 %v2392, %v2435
    %v2441 = vadd.f32 %v2393, %v2424
    %v2442 = vadd.f32 %v2394, %v2436
    %v2443 = vadd.f32 %v2395, %v2425
    %v2444 = vadd.f32 %v2396, %v2437
    %v2445 = vadd.f32 %v2397, %v2426
    %v2446 = vadd.f32 %v2398, %v2438
    %s2447 = scalar_lea.vmem %s2, 224
    %v2448 = vld [vmem:[%s2447] sm:$0xff]
    %v2449 = vld [vmem:[%s2447 + $0x8] sm:$0xff]
    %v2450 = vld [vmem:[%s2447 + $0x10] sm:$0xff]
    %v2451 = vld [vmem:[%s2447 + $0x18] sm:$0xff]
    %2453 = vset.pattern.permute.xlu0 0
    %2454 = vperm.xlu0 %2453, %v2448
    %v2455 = vpop.permute.xlu0 %2454
    %2458 = vset.pattern.permute.xlu0 0
    %2459 = vperm.xlu0 %2458, %v2449
    %v2460 = vpop.permute.xlu0 %2459
    %2463 = vset.pattern.permute.xlu0 0
    %2464 = vperm.xlu0 %2463, %v2450
    %v2465 = vpop.permute.xlu0 %2464
    %2468 = vset.pattern.permute.xlu0 0
    %2469 = vperm.xlu0 %2468, %v2451
    %v2470 = vpop.permute.xlu0 %2469
    %v2472 = vadd.f32 %v2439, %v2455
    %v2473 = vadd.f32 %v2440, %v2455
    %v2474 = vadd.f32 %v2441, %v2460
    %v2475 = vadd.f32 %v2442, %v2460
    %v2476 = vadd.f32 %v2443, %v2465
    %v2477 = vadd.f32 %v2444, %v2465
    %v2478 = vadd.f32 %v2445, %v2470
    %v2479 = vadd.f32 %v2446, %v2470
    %v2480 = vmul.f32 %v2472, %v320
    %v2481 = vmul.f32 %v2473, %v324
    %v2482 = vmul.f32 %v2474, %v320
    %v2483 = vmul.f32 %v2475, %v324
    %v2484 = vmul.f32 %v2476, %v320
    %v2485 = vmul.f32 %v2477, %v324
    %v2486 = vmul.f32 %v2478, %v320
    %v2487 = vmul.f32 %v2479, %v324
    %v2488 = vmul.f32 %v2480, 0.2
    %v2489 = vmul.f32 %v2481, 0.2
    %v2490 = vmul.f32 %v2482, 0.2
    %v2491 = vmul.f32 %v2483, 0.2
    %v2492 = vmul.f32 %v2484, 0.2
    %v2493 = vmul.f32 %v2485, 0.2
    %v2494 = vmul.f32 %v2486, 0.2
    %v2495 = vmul.f32 %v2487, 0.2
    %v2496 = vmax.f32 %v2480, %v2488
    %v2497 = vmax.f32 %v2481, %v2489
    %v2498 = vmax.f32 %v2482, %v2490
    %v2499 = vmax.f32 %v2483, %v2491
    %v2500 = vmax.f32 %v2484, %v2492
    %v2501 = vmax.f32 %v2485, %v2493
    %v2502 = vmax.f32 %v2486, %v2494
    %v2503 = vmax.f32 %v2487, %v2495
    %s2504 = scalar_lea.vmem %s1, 384
    %v2505 = vld [vmem:[%s2504] sm:$0xf]
    %v2506 = vld [vmem:[%s2504 + $0x4] sm:$0xf]
    %v2507 = vld [vmem:[%s2504 + $0x8] sm:$0xf]
    %v2508 = vld [vmem:[%s2504 + $0xc] sm:$0xf]
    %v2509 = vld [vmem:[%s2504 + $0x10] sm:$0xf]
    %v2510 = vld [vmem:[%s2504 + $0x14] sm:$0xf]
    %v2511 = vld [vmem:[%s2504 + $0x18] sm:$0xf]
    %v2512 = vld [vmem:[%s2504 + $0x1c] sm:$0xf]
    %v2513 = vld [vmem:[%s2504 + $0x20] sm:$0xf]
    %v2514 = vld [vmem:[%s2504 + $0x24] sm:$0xf]
    %v2515 = vld [vmem:[%s2504 + $0x28] sm:$0xf]
    %v2516 = vld [vmem:[%s2504 + $0x2c] sm:$0xf]
    %v2517 = vpack.c.bf16 %v2498, %v2496
    %v2518 = vpack.c.bf16 %v2499, %v2497
    %v2519 = vpack.c.bf16 %v2502, %v2500
    %v2520 = vpack.c.bf16 %v2503, %v2501
    %v2533 = vunpack.c.l.b16 %v2505
    %v2534 = vunpack.c.l.b16 %v2506
    %v2535 = vunpack.c.l.b16 %v2507
    %v2536 = vunpack.c.l.b16 %v2508
    %v2537 = vunpack.c.l.b16 %v2509
    %v2538 = vunpack.c.l.b16 %v2510
    %v2539 = vunpack.c.l.b16 %v2511
    %v2540 = vunpack.c.l.b16 %v2512
    %v2541 = vunpack.c.l.b16 %v2513
    %v2542 = vunpack.c.l.b16 %v2514
    %v2543 = vunpack.c.l.b16 %v2515
    %v2544 = vunpack.c.l.b16 %v2516
    %v2545 = vpack.c.b16 %v2534, %v2533
    %v2546 = vpack.c.b16 %v2536, %v2535
    %v2547 = vpack.c.b16 %v2538, %v2537
    %v2548 = vpack.c.b16 %v2540, %v2539
    %v2549 = vpack.c.b16 %v2542, %v2541
    %v2550 = vpack.c.b16 %v2544, %v2543
    %v2552 = vsel %vm74, %v2545, 0
    %v2555 = vsel %vm74, %v2546, 0
    %v2558 = vsel %vm74, %v2547, 0
    %v2561 = vsel %vm74, %v2548, 0
    %v2564 = vsel %vm74, %v2549, 0
    %v2567 = vsel %vm74, %v2550, 0
    %2569 = vmatprep.subr.bf16.mxu0 %v2518
    %2570 = vmatpush1.bf16.msra.mxu0 %v2517
    %2571 = vmatprep.subr.bf16.mxu0 %v2520
    %2572 = vmatpush1.bf16.msra.mxu0 %v2519
    %2573 = vmatprep.subr.bf16.mxu0 0
    %2574 = vmatpush1.bf16.msra.mxu0 0
    %2575 = vmatprep.subr.bf16.mxu0 0
    %2576 = vmatpush1.bf16.msra.mxu0 0
    %2577 = vmatprep.subr.bf16.mxu0 0
    %2578 = vmatpush1.bf16.msra.mxu0 0
    %2579 = vmatprep.subr.bf16.mxu0 0
    %2580 = vmatpush1.bf16.msra.mxu0 0
    %2581 = vmatprep.subr.bf16.mxu0 0
    %2582 = vmatpush1.bf16.msra.mxu0 0
    %2583 = vmatprep.subr.bf16.mxu0 0
    %2584 = vmatpush1.bf16.msra.mxu0 0
    %2585 = vmatprep.subr.bf16.mxu0 0
    %2586 = vmatpush1.bf16.msra.mxu0 0
    %2587 = vmatprep.subr.bf16.mxu0 0
    %2588 = vmatpush1.bf16.msra.mxu0 0
    %2589 = vmatprep.subr.bf16.mxu0 0
    %2590 = vmatpush1.bf16.msra.mxu0 0
    %2591 = vmatprep.subr.bf16.mxu0 0
    %2592 = vmatpush1.bf16.msra.mxu0 0
    %2593 = vmatprep.subr.bf16.mxu0 0
    %2594 = vmatpush1.bf16.msra.mxu0 0
    %2595 = vmatprep.subr.bf16.mxu0 0
    %2596 = vmatpush1.bf16.msra.mxu0 0
    %2597 = vmatprep.subr.bf16.mxu0 0
    %2598 = vmatpush1.bf16.msra.mxu0 0
    %2599 = vmatprep.subr.bf16.mxu0 0
    %2600 = vmatpush1.bf16.msra.mxu0 0
    %2601 = vmatprep.mubr.bf16.mxu0 0
    %2602 = vmatmul.mubr.bf16.gmra.mrb[0].mxu0 %v2552
    %v2603 = vpop.f32.mrb[0].mxu0
    %v2604 = vadd.f32 0.0, %v2603
    %v2605 = vpop.f32.mrb[0].mxu0
    %v2606 = vadd.f32 0.0, %v2605
    %v2607 = vpop.f32.mrb[0].mxu0
    %v2608 = vadd.f32 0.0, %v2607
    %v2609 = vpop.f32.mrb[0].mxu0
    %v2610 = vadd.f32 0.0, %v2609
    %2611 = vmatprep.mubr.bf16.mxu0 0
    %2612 = vmatmul.mubr.bf16.gmra.mrb[0].mxu0 %v2555
    %v2613 = vpop.f32.mrb[0].mxu0
    %v2614 = vadd.f32 0.0, %v2613
    %v2615 = vpop.f32.mrb[0].mxu0
    %v2616 = vadd.f32 0.0, %v2615
    %v2617 = vpop.f32.mrb[0].mxu0
    %v2618 = vadd.f32 0.0, %v2617
    %v2619 = vpop.f32.mrb[0].mxu0
    %v2620 = vadd.f32 0.0, %v2619
    %2621 = vmatprep.mubr.bf16.mxu0 0
    %2622 = vmatmul.mubr.bf16.gmra.mrb[0].mxu0 %v2558
    %v2623 = vpop.f32.mrb[0].mxu0
    %v2624 = vadd.f32 0.0, %v2623
    %v2625 = vpop.f32.mrb[0].mxu0
    %v2626 = vadd.f32 0.0, %v2625
    %v2627 = vpop.f32.mrb[0].mxu0
    %v2628 = vadd.f32 0.0, %v2627
    %v2629 = vpop.f32.mrb[0].mxu0
    %v2630 = vadd.f32 0.0, %v2629
    %2631 = vmatprep.mubr.bf16.mxu0 0
    %2632 = vmatmul.mubr.bf16.gmra.mrb[0].mxu0 %v2561
    %v2633 = vpop.f32.mrb[0].mxu0
    %v2634 = vadd.f32 0.0, %v2633
    %v2635 = vpop.f32.mrb[0].mxu0
    %v2636 = vadd.f32 0.0, %v2635
    %v2637 = vpop.f32.mrb[0].mxu0
    %v2638 = vadd.f32 0.0, %v2637
    %v2639 = vpop.f32.mrb[0].mxu0
    %v2640 = vadd.f32 0.0, %v2639
    %2641 = vmatprep.mubr.bf16.mxu0 0
    %2642 = vmatmul.mubr.bf16.gmra.mrb[0].mxu0 %v2564
    %v2643 = vpop.f32.mrb[0].mxu0
    %v2644 = vadd.f32 0.0, %v2643
    %v2645 = vpop.f32.mrb[0].mxu0
    %v2646 = vadd.f32 0.0, %v2645
    %v2647 = vpop.f32.mrb[0].mxu0
    %v2648 = vadd.f32 0.0, %v2647
    %v2649 = vpop.f32.mrb[0].mxu0
    %v2650 = vadd.f32 0.0, %v2649
    %2651 = vmatprep.mubr.bf16.mxu0 0
    %2652 = vmatmul.mubr.bf16.gmra.mrb[0].mxu0 %v2567
    %v2653 = vpop.f32.mrb[0].mxu0
    %v2654 = vadd.f32 0.0, %v2653
    %v2655 = vpop.f32.mrb[0].mxu0
    %v2656 = vadd.f32 0.0, %v2655
    %v2657 = vpop.f32.mrb[0].mxu0
    %v2658 = vadd.f32 0.0, %v2657
    %v2659 = vpop.f32.mrb[0].mxu0
    %v2660 = vadd.f32 0.0, %v2659
    %2661 = vdwg.mxu0
    %2670 = vrot.lane.b32.xlu0 %v2604, 1
    %v2671 = vpop.permute.xlu0 %2670
    %2672 = vrot.lane.b32.xlu0 %v2606, 1
    %v2673 = vpop.permute.xlu0 %2672
    %2674 = vrot.lane.b32.xlu0 %v2608, 1
    %v2675 = vpop.permute.xlu0 %2674
    %2676 = vrot.lane.b32.xlu0 %v2610, 1
    %v2677 = vpop.permute.xlu0 %2676
    %2678 = vrot.lane.b32.xlu0 %v2614, 1
    %v2679 = vpop.permute.xlu0 %2678
    %2680 = vrot.lane.b32.xlu0 %v2616, 1
    %v2681 = vpop.permute.xlu0 %2680
    %2682 = vrot.lane.b32.xlu0 %v2618, 1
    %v2683 = vpop.permute.xlu0 %2682
    %2684 = vrot.lane.b32.xlu0 %v2620, 1
    %v2685 = vpop.permute.xlu0 %2684
    %v2686 = vsel %vm210, %v2671, %v2673
    %v2687 = vsel %vm210, %v2675, %v2677
    %v2688 = vsel %vm210, %v2679, %v2681
    %v2689 = vsel %vm210, %v2683, %v2685
    %v2698 = vsel %vm210, 0.0, %v2671
    %v2699 = vsel %vm210, 0.0, %v2675
    %v2700 = vsel %vm210, 0.0, %v2679
    %v2701 = vsel %vm210, 0.0, %v2683
    %v2702 = vadd.f32 %v2698, %v2624
    %v2703 = vadd.f32 %v2686, %v2626
    %v2704 = vadd.f32 %v2699, %v2628
    %v2705 = vadd.f32 %v2687, %v2630
    %v2706 = vadd.f32 %v2700, %v2634
    %v2707 = vadd.f32 %v2688, %v2636
    %v2708 = vadd.f32 %v2701, %v2638
    %v2709 = vadd.f32 %v2689, %v2640
    %2718 = vrot.lane.b32.xlu0 %v2644, 127
    %v2719 = vpop.permute.xlu0 %2718
    %2720 = vrot.lane.b32.xlu0 %v2646, 127
    %v2721 = vpop.permute.xlu0 %2720
    %2722 = vrot.lane.b32.xlu0 %v2648, 127
    %v2723 = vpop.permute.xlu0 %2722
    %2724 = vrot.lane.b32.xlu0 %v2650, 127
    %v2725 = vpop.permute.xlu0 %2724
    %2726 = vrot.lane.b32.xlu0 %v2654, 127
    %v2727 = vpop.permute.xlu0 %2726
    %2728 = vrot.lane.b32.xlu0 %v2656, 127
    %v2729 = vpop.permute.xlu0 %2728
    %2730 = vrot.lane.b32.xlu0 %v2658, 127
    %v2731 = vpop.permute.xlu0 %2730
    %2732 = vrot.lane.b32.xlu0 %v2660, 127
    %v2733 = vpop.permute.xlu0 %2732
    %v2734 = vsel %vm259, %v2719, %v2721
    %v2735 = vsel %vm259, %v2723, %v2725
    %v2736 = vsel %vm259, %v2727, %v2729
    %v2737 = vsel %vm259, %v2731, %v2733
    %v2746 = vsel %vm259, %v2721, 0.0
    %v2747 = vsel %vm259, %v2725, 0.0
    %v2748 = vsel %vm259, %v2729, 0.0
    %v2749 = vsel %vm259, %v2733, 0.0
    %v2750 = vadd.f32 %v2702, %v2734
    %v2751 = vadd.f32 %v2703, %v2746
    %v2752 = vadd.f32 %v2704, %v2735
    %v2753 = vadd.f32 %v2705, %v2747
    %v2754 = vadd.f32 %v2706, %v2736
    %v2755 = vadd.f32 %v2707, %v2748
    %v2756 = vadd.f32 %v2708, %v2737
    %v2757 = vadd.f32 %v2709, %v2749
    %s2758 = scalar_lea.vmem %s2, 256
    %v2759 = vld [vmem:[%s2758] sm:$0xff]
    %v2760 = vld [vmem:[%s2758 + $0x8] sm:$0xff]
    %v2761 = vld [vmem:[%s2758 + $0x10] sm:$0xff]
    %v2762 = vld [vmem:[%s2758 + $0x18] sm:$0xff]
    %2764 = vset.pattern.permute.xlu0 0
    %2765 = vperm.xlu0 %2764, %v2759
    %v2766 = vpop.permute.xlu0 %2765
    %2769 = vset.pattern.permute.xlu0 0
    %2770 = vperm.xlu0 %2769, %v2760
    %v2771 = vpop.permute.xlu0 %2770
    %2774 = vset.pattern.permute.xlu0 0
    %2775 = vperm.xlu0 %2774, %v2761
    %v2776 = vpop.permute.xlu0 %2775
    %2779 = vset.pattern.permute.xlu0 0
    %2780 = vperm.xlu0 %2779, %v2762
    %v2781 = vpop.permute.xlu0 %2780
    %v2783 = vadd.f32 %v2750, %v2766
    %v2784 = vadd.f32 %v2751, %v2766
    %v2785 = vadd.f32 %v2752, %v2771
    %v2786 = vadd.f32 %v2753, %v2771
    %v2787 = vadd.f32 %v2754, %v2776
    %v2788 = vadd.f32 %v2755, %v2776
    %v2789 = vadd.f32 %v2756, %v2781
    %v2790 = vadd.f32 %v2757, %v2781
    %v2791 = vmul.f32 %v2783, %v320
    %v2792 = vmul.f32 %v2784, %v324
    %v2793 = vmul.f32 %v2785, %v320
    %v2794 = vmul.f32 %v2786, %v324
    %v2795 = vmul.f32 %v2787, %v320
    %v2796 = vmul.f32 %v2788, %v324
    %v2797 = vmul.f32 %v2789, %v320
    %v2798 = vmul.f32 %v2790, %v324
    %2799 = vst [vmem:[#allocation2] sm:$0xff] %v2791
    %2800 = vst [vmem:[#allocation2 + $0x8] sm:$0xff] %v2792
    %2801 = vst [vmem:[#allocation2 + $0x10] sm:$0xff] %v2793
    %2802 = vst [vmem:[#allocation2 + $0x18] sm:$0xff] %v2794
    %2803 = vst [vmem:[#allocation2 + $0x20] sm:$0xff] %v2795
    %2804 = vst [vmem:[#allocation2 + $0x28] sm:$0xff] %v2796
    %2805 = vst [vmem:[#allocation2 + $0x30] sm:$0xff] %v2797
    %2806 = vst [vmem:[#allocation2 + $0x38] sm:$0xff] %v2798
    // Predicated region
    $region18: #{tpu_custom_call.1} parent=1 // pred_check
      _
    $region19: #{tpu_custom_call.1} parent=1 // pred_check_branch
      %2808 = sbr.rel (0) target = $region21
    $region20: #{tpu_custom_call.1} parent=1 // pred_region
      %s2810 = ssub.s32 1024, 1024
      %2811 = vsyncadd [#allocation3], %s2810
      %s2812 = sshll.u32 [#allocation2], 4
      %s2813 = int_to_ptr.vmem [resolvable:$true] %s2812
      %2818 = dma.vmem_to_hbm [thread:$0]  %s2813, 1024, %s4, [#allocation3], 256, 256, 16
    $region21: #{tpu_custom_call.1} parent=1 // pred_fallthru
      _
    // Predicated region
    $region22: #{tpu_custom_call.1} parent=1 // pred_check
      _
    $region23: #{tpu_custom_call.1} parent=1 // pred_check_branch
      %2820 = sbr.rel (0) target = $region25
    $region24: #{tpu_custom_call.1} parent=1 // pred_region
      %2821 = dma.done [#allocation3], 1024
    $region25: #{tpu_custom_call.1} parent=1 // pred_fallthru
      _
    %2822 = vsyncpa [#allocation3], 1

</llo_original>
